<compile_context>
chip_gen: v6e
topology: v6e:2x2x1
jax: 0.10.0
libtpu: 0.0.40
codegen_flags: <defaults>
</compile_context>

<pallas_src>
import functools

import jax
import jax.numpy as jnp
from jax import lax
from jax.experimental import pallas as pl
from jax.experimental.pallas import tpu as pltpu


_VMEM_LIMIT_BYTES = 48 * 1024 * 1024   # > default scoped limit, < v7x 64 MiB physical
_BLOCK_BUDGET_BYTES = 16 * 1024 * 1024  # per-pipelined-working-set heuristic budget


def _const_spec(block_shape, index_map):
    """BlockSpec for a constant-index operand; single-buffered when supported."""
    try:
        return pl.BlockSpec(block_shape, index_map, pipeline_mode=pl.Buffered(1))
    except Exception:  # older jax without pipeline_mode / Buffered
        return pl.BlockSpec(block_shape, index_map)


def _pick_block(total, per_item_bytes, budget_bytes, align=1):
    """Largest divisor of `total` (respecting `align` or == total) within budget."""
    divs = [d for d in range(1, total + 1) if total % d == 0]
    valid = [d for d in divs if d == total or d % align == 0]
    fits = [d for d in valid if d * per_item_bytes <= budget_bytes]
    return max(fits) if fits else min(valid)


# ----------------------------------------------------------------------------
# Kernel 1: fused batch-blocked front-end
#   one-hot embedding -> depth x [im2col Conv1d + LayerNorm + LeakyReLU + mask]
#   -> hoisted LSTM input projection, written time-major & direction-split.
# ----------------------------------------------------------------------------
def _encode_kernel(len_ref, tok_ref, emb_ref, wc_ref, bc_ref, g_ref, be_ref,
                   wi_ref, bi_ref, zo_ref, xpad_ref, *, depth, ksize, eps,
                   neg_slope):
    Bb, T, _ = tok_ref.shape
    V, C = emb_ref.shape
    H8 = wi_ref.shape[1]
    H4 = H8 // 2
    p = (ksize - 1) // 2
    BT = Bb * T

    # keep[b, t] = t < L[b]  (inverse of the padding mask; built in-kernel)
    lens = len_ref[...].reshape(Bb, 1, 1)                           # (Bb,1,1) int32
    pos = lax.broadcasted_iota(jnp.int32, (Bb, T, 1), 1)
    keep = (pos < lens).reshape(BT, 1)                              # (BT, 1) bool

    # --- embedding lookup as one big one-hot @ table on the MXU (bf16, f32 acc) ---
    tok = tok_ref[...].reshape(BT, 1)
    col = lax.broadcasted_iota(jnp.int32, (BT, V), 1)
    onehot = (col == tok).astype(jnp.bfloat16)
    x = jnp.dot(onehot, emb_ref[...],
                preferred_element_type=jnp.float32)                 # (BT, C) f32
    x = jnp.where(keep, x, 0.0)

    # --- fused CNN stack; zero-padded bf16 VMEM scratch reused across layers ---
    if p > 0:
        xpad_ref[:, 0:p, :] = jnp.zeros((Bb, p, C), jnp.bfloat16)
        xpad_ref[:, p + T:p + T + p, :] = jnp.zeros((Bb, p, C), jnp.bfloat16)
    for d in range(depth):                                          # static unroll
        xpad_ref[:, p:p + T, :] = x.reshape(Bb, T, C).astype(jnp.bfloat16)
        xp = xpad_ref[...]                                          # (Bb, T+2p, C) bf16
        # im2col: one (BT, K*C) @ (K*C, C) matmul per layer
        xcol = jnp.concatenate(
            [xp[:, k:k + T, :].reshape(BT, C) for k in range(ksize)], axis=-1)
        acc = jnp.dot(xcol, wc_ref[d],
                      preferred_element_type=jnp.float32) + bc_ref[d]  # (BT, C)
        # LayerNorm over channels (f32)
        mean = jnp.mean(acc, axis=-1, keepdims=True)
        var = jnp.mean(jnp.square(acc - mean), axis=-1, keepdims=True)
        y = (acc - mean) * lax.rsqrt(var + eps)
        y = y * g_ref[d] + be_ref[d]
        # LeakyReLU(0.2); Dropout(0.2) is identity in eval mode.
        y = jnp.where(y >= 0.0, y, neg_slope * y)
        x = jnp.where(keep, y, 0.0)                                 # masked_fill

    # --- LSTM input projection hoisted out of the recurrence ---
    z = jnp.dot(x.astype(jnp.bfloat16), wi_ref[...],
                preferred_element_type=jnp.float32) + bi_ref[...]   # (BT, 8H) f32
    # write time-major, direction-split: zo[(dir), T, Bb, 4H] in bf16
    for dir_ in range(2):
        zd = z[:, dir_ * H4:(dir_ + 1) * H4].reshape(Bb, T, H4)
        zo_ref[dir_] = jnp.transpose(zd, (1, 0, 2)).astype(zo_ref.dtype)


def encode_frontend(tokens, lens2, emb_bf16, wc_col, bc, g, be, wi_bf16, bi,
                    *, depth, ksize):
    B, T = tokens.shape
    V, C = emb_bf16.shape
    H8 = wi_bf16.shape[1]
    H4 = H8 // 2
    p = (ksize - 1) // 2
    tok3 = tokens.astype(jnp.int32).reshape(B, T, 1)

    # batch-block size: biggest divisor of B (full-B or multiple of 8 to keep the
    # second-minor block dim aligned) whose working set fits the VMEM budget.
    per_ex_bytes = 4 * T * (V + ksize * C + 16 * C)
    Bblk = _pick_block(B, per_ex_bytes, _BLOCK_BUDGET_BYTES, align=8)
    nb = B // Bblk

    kernel = functools.partial(_encode_kernel, depth=depth, ksize=ksize,
                               eps=1e-5, neg_slope=0.2)
    grid_spec = pltpu.PrefetchScalarGridSpec(
        num_scalar_prefetch=0,
        grid=(nb,),
        in_specs=[
            pl.BlockSpec((Bblk, 1), lambda b: (b, 0)),              # lengths
            pl.BlockSpec((Bblk, T, 1), lambda b: (b, 0, 0)),        # tokens
            _const_spec((V, C), lambda b: (0, 0)),                  # embedding
            _const_spec(wc_col.shape, lambda b: (0, 0, 0)),         # conv weights
            _const_spec(bc.shape, lambda b: (0, 0, 0)),             # conv bias
            _const_spec(g.shape, lambda b: (0, 0, 0)),              # LN gamma
            _const_spec(be.shape, lambda b: (0, 0, 0)),             # LN beta
            _const_spec(wi_bf16.shape, lambda b: (0, 0)),           # LSTM W_ih (both dirs)
            _const_spec(bi.shape, lambda b: (0, 0)),                # LSTM biases
        ],
        out_specs=pl.BlockSpec((2, T, Bblk, H4), lambda b: (0, 0, b, 0)),
        scratch_shapes=[pltpu.VMEM((Bblk, T + 2 * p, C), jnp.bfloat16)],
    )
    return pl.pallas_call(
        kernel,
        out_shape=jax.ShapeDtypeStruct((2, T, B, H4), jnp.bfloat16),
        grid_spec=grid_spec,
        compiler_params=pltpu.CompilerParams(
            dimension_semantics=("parallel",),
            vmem_limit_bytes=_VMEM_LIMIT_BYTES),
    )(lens2, tok3, emb_bf16, wc_col, bc, g, be, wi_bf16, bi)


# ----------------------------------------------------------------------------
# Kernel 2: time-chunked, length-aware, direction-fused BiLSTM recurrence.
# Per step: one block-diagonal bf16 (B,2H)@(2H,8H) recurrent matmul + f32 gate
# math for both directions; per-row length gating freezes state and writes
# zeros for t >= length (packed-seq semantics).  (h,c) carried in VMEM scratch.
# ----------------------------------------------------------------------------
def _bilstm_kernel(zf_ref, zb_ref, wh_ref, len_ref, of_ref, ob_ref,
                   hf_ref, cf_ref, hb_ref, cb_ref, *, t_total):
    Tt, B, H4 = zf_ref.shape
    H = H4 // 4

    @pl.when(pl.program_id(0) == 0)
    def _():
        zero = jnp.zeros((B, H), jnp.float32)
        hf_ref[...] = zero
        cf_ref[...] = zero
        hb_ref[...] = zero
        cb_ref[...] = zero

    wh = wh_ref[...]                                               # (2H, 8H) bf16
    lens = len_ref[...]                                            # (B, 1) int32
    t0 = pl.program_id(0) * Tt

    def gates(zp, c):                                              # zp: (B, 4H) f32
        i = jax.nn.sigmoid(zp[:, 0:H])
        f = jax.nn.sigmoid(zp[:, H:2 * H])
        g = jnp.tanh(zp[:, 2 * H:3 * H])
        o = jax.nn.sigmoid(zp[:, 3 * H:4 * H])
        c_new = f * c + i * g
        return o * jnp.tanh(c_new), c_new

    def step(s, carry):
        h_f, c_f, h_b, c_b = carry                                 # (B, H) f32 each
        tf = t0 + s                                                # global fwd time
        tb = (t_total - 1) - tf                                    # global bwd time
        sb = Tt - 1 - s                                            # local bwd index
        ztf = zf_ref[pl.ds(s, 1), :, :][0].astype(jnp.float32)     # (B, 4H)
        ztb = zb_ref[pl.ds(sb, 1), :, :][0].astype(jnp.float32)    # (B, 4H)
        hcat = jnp.concatenate([h_f, h_b], axis=-1).astype(jnp.bfloat16)  # (B, 2H)
        r = jnp.dot(hcat, wh, preferred_element_type=jnp.float32)  # (B, 8H)
        hf_new, cf_new = gates(ztf + r[:, :H4], c_f)
        hb_new, cb_new = gates(ztb + r[:, H4:], c_b)
        act_f = tf < lens                                          # (B, 1) bool
        act_b = tb < lens
        of_ref[pl.ds(s, 1), :, :] = jnp.where(act_f, hf_new, 0.0)[None]
        ob_ref[pl.ds(sb, 1), :, :] = jnp.where(act_b, hb_new, 0.0)[None]
        return (jnp.where(act_f, hf_new, h_f), jnp.where(act_f, cf_new, c_f),
                jnp.where(act_b, hb_new, h_b), jnp.where(act_b, cb_new, c_b))

    carry0 = (hf_ref[...], cf_ref[...], hb_ref[...], cb_ref[...])
    h_f, c_f, h_b, c_b = lax.fori_loop(0, Tt, step, carry0)
    hf_ref[...] = h_f
    cf_ref[...] = c_f
    hb_ref[...] = h_b
    cb_ref[...] = c_b


def bilstm_recurrence(z, lens2, whcat):
    # z: (2, T, B, 4H) bf16, time-major pre-projected gate activations per direction
    _, T, B, H4 = z.shape
    H = H4 // 4

    per_t_bytes = 48 * B * H           # 2 dirs x (2-buf bf16 gate slab + 2-buf f32 out)
    Tt = _pick_block(T, per_t_bytes, _BLOCK_BUDGET_BYTES, align=1)
    nc = T // Tt

    kernel = functools.partial(_bilstm_kernel, t_total=T)
    grid_spec = pltpu.PrefetchScalarGridSpec(
        num_scalar_prefetch=0,
        grid=(nc,),
        in_specs=[
            pl.BlockSpec((None, Tt, B, H4), lambda i: (0, i, 0, 0)),          # fwd chunk
            pl.BlockSpec((None, Tt, B, H4), lambda i: (1, nc - 1 - i, 0, 0)),  # bwd chunk
            _const_spec((2 * H, 8 * H), lambda i: (0, 0)),                    # block-diag W_hh
            _const_spec((B, 1), lambda i: (0, 0)),                            # lengths
        ],
        out_specs=[
            pl.BlockSpec((Tt, B, H), lambda i: (i, 0, 0)),
            pl.BlockSpec((Tt, B, H), lambda i: (nc - 1 - i, 0, 0)),
        ],
        scratch_shapes=[pltpu.VMEM((B, H), jnp.float32)] * 4,
    )
    of, ob = pl.pallas_call(
        kernel,
        out_shape=(jax.ShapeDtypeStruct((T, B, H), jnp.float32),
                   jax.ShapeDtypeStruct((T, B, H), jnp.float32)),
        grid_spec=grid_spec,
        compiler_params=pltpu.CompilerParams(
            dimension_semantics=("arbitrary",),
            vmem_limit_bytes=_VMEM_LIMIT_BYTES),
    )(z, z, whcat, lens2)
    return of, ob


# ----------------------------------------------------------------------------
# Full forward (glue in plain JAX, compute in the two Pallas kernels above)
# ----------------------------------------------------------------------------
def text_encoder_forward(params, tokens, input_lengths, m=None):
    # The padding mask is rebuilt in-kernel from input_lengths; `m` is accepted
    # only for API parity with the PyTorch module (it equals length_to_mask).
    del m
    depth = len(params['cnn'])
    ksize = params['cnn'][0]['w_eff'].shape[-1]
    C = params['embedding'].shape[1]
    H = C // 2
    B, _ = tokens.shape

    # bf16 MXU operands (f32 accumulation inside the kernels)
    emb_bf16 = params['embedding'].astype(jnp.bfloat16)
    # per-layer im2col weights: rows ordered [tap 0: cin..., tap 1: cin..., ...]
    wc_col = jnp.stack(
        [jnp.transpose(lp['w_eff'], (2, 1, 0)).reshape(ksize * C, C)
         for lp in params['cnn']]).astype(jnp.bfloat16)             # (depth, K*C, C)
    bc = jnp.stack([lp['bias'].reshape(1, C) for lp in params['cnn']])
    g = jnp.stack([lp['gamma'].reshape(1, C) for lp in params['cnn']])
    be = jnp.stack([lp['beta'].reshape(1, C) for lp in params['cnn']])

    lstm = params['lstm']
    wi_bf16 = jnp.concatenate([lstm['w_ih_f'].T, lstm['w_ih_b'].T],
                              axis=1).astype(jnp.bfloat16)          # (C, 8H)
    bi = jnp.concatenate([lstm['b_ih_f'] + lstm['b_hh_f'],
                          lstm['b_ih_b'] + lstm['b_hh_b']]).reshape(1, 8 * H)
    # block-diagonal recurrent weight (2H, 8H) so one matmul drives both directions
    whcat = jnp.zeros((2 * H, 8 * H), jnp.float32)
    whcat = whcat.at[:H, :4 * H].set(lstm['w_hh_f'].T)
    whcat = whcat.at[H:, 4 * H:].set(lstm['w_hh_b'].T)
    whcat = whcat.astype(jnp.bfloat16)

    lens2 = input_lengths.astype(jnp.int32).reshape(B, 1)

    z = encode_frontend(tokens, lens2, emb_bf16, wc_col, bc, g, be,
                        wi_bf16, bi, depth=depth, ksize=ksize)      # (2, T, B, 4H) bf16
    of, ob = bilstm_recurrence(z, lens2, whcat)                     # (T, B, H) x2 f32
    y = jnp.concatenate([of, ob], axis=-1)                          # (T, B, 2H)
    return jnp.transpose(y, (1, 2, 0))                              # (B, C, T)


def init_params(key, channels, kernel_size, depth, n_symbols):
    C, H = channels, channels // 2
    keys = jax.random.split(key, depth + 2)
    params = {'embedding': 0.1 * jax.random.normal(keys[0], (n_symbols, C), jnp.float32)}
    cnn = []
    for d in range(depth):
        k1, k2, k3 = jax.random.split(keys[1 + d], 3)
        v = 0.1 * jax.random.normal(k1, (C, C, kernel_size), jnp.float32)
        gw = 1.0 + 0.1 * jax.random.normal(k2, (C,), jnp.float32)
        # weight_norm (dim=0): W = g * V / ||V||  with norm over dims (1, 2)
        vnorm = jnp.sqrt(jnp.sum(v * v, axis=(1, 2), keepdims=True)) + 1e-12
        w_eff = gw.reshape(C, 1, 1) * v / vnorm
        cnn.append(dict(w_eff=w_eff,
                        bias=0.1 * jax.random.normal(k3, (C,), jnp.float32),
                        gamma=jnp.ones((C,), jnp.float32),
                        beta=jnp.zeros((C,), jnp.float32)))
    params['cnn'] = cnn
    kl = jax.random.split(keys[1 + depth], 8)
    params['lstm'] = dict(
        w_ih_f=0.1 * jax.random.normal(kl[0], (4 * H, C), jnp.float32),
        w_hh_f=0.1 * jax.random.normal(kl[1], (4 * H, H), jnp.float32),
        b_ih_f=0.1 * jax.random.normal(kl[2], (4 * H,), jnp.float32),
        b_hh_f=0.1 * jax.random.normal(kl[3], (4 * H,), jnp.float32),
        w_ih_b=0.1 * jax.random.normal(kl[4], (4 * H, C), jnp.float32),
        w_hh_b=0.1 * jax.random.normal(kl[5], (4 * H, H), jnp.float32),
        b_ih_b=0.1 * jax.random.normal(kl[6], (4 * H,), jnp.float32),
        b_hh_b=0.1 * jax.random.normal(kl[7], (4 * H,), jnp.float32),
    )
    return params


if __name__ == "__main__":
    B, T, C = 2, 8, 32
    n_symbols, kernel_size, depth = 40, 5, 3

    key = jax.random.PRNGKey(0)
    kp, kt = jax.random.split(key)
    params = init_params(kp, C, kernel_size, depth, n_symbols)

    tokens = jax.random.randint(kt, (B, T), 0, n_symbols, jnp.int32)
    input_lengths = jnp.array([T, 5], jnp.int32)
    # length_to_mask: mask[b, t] = (t + 1) > length[b]
    m = (jnp.arange(T)[None, :] + 1) > input_lengths[:, None]

    fwd = jax.jit(text_encoder_forward)
    out = fwd(params, tokens, input_lengths, m)
    out = jax.block_until_ready(out)

    assert out.shape == (B, C, T), out.shape
    assert bool(jnp.all(jnp.isfinite(out)))
    # masked (padded) positions must be exactly zero
    assert bool(jnp.all(jnp.where(m[:, None, :], out, 0.0) == 0.0))
    print("KERNEL_OK")
</pallas_src>

<mosaic_0001>
module attributes {stable_mosaic.version = 11 : i64} {
  func.func @_encode_kernel(%arg0: i32, %arg1: memref<2x1xi32, #tpu.memory_space<vmem>>, %arg2: memref<2x8x1xi32, #tpu.memory_space<vmem>>, %arg3: memref<40x32xbf16, #tpu.memory_space<vmem>>, %arg4: memref<3x160x32xbf16, #tpu.memory_space<vmem>>, %arg5: memref<3x1x32xf32, #tpu.memory_space<vmem>>, %arg6: memref<3x1x32xf32, #tpu.memory_space<vmem>>, %arg7: memref<3x1x32xf32, #tpu.memory_space<vmem>>, %arg8: memref<32x128xbf16, #tpu.memory_space<vmem>>, %arg9: memref<1x128xf32, #tpu.memory_space<vmem>>, %arg10: memref<2x8x2x64xbf16, #tpu.memory_space<vmem>>, %arg11: memref<2x12x32xbf16, #tpu.memory_space<vmem>>) attributes {dimension_semantics = [#tpu.dimension_semantics<parallel>], iteration_bounds = array<i64: 1>, scalar_prefetch = 0 : i64, scratch_operands = 1 : i64, tpu.core_type = #tpu.core_type<tc>, window_params = [{transform_indices = @transform_0, window_bounds = array<i64: 2, 1>}, {transform_indices = @transform_1, window_bounds = array<i64: 2, 8, 1>}, {pipeline_mode = #tpu.pipeline_mode<synchronous>, transform_indices = @transform_2, window_bounds = array<i64: 40, 32>}, {pipeline_mode = #tpu.pipeline_mode<synchronous>, transform_indices = @transform_3, window_bounds = array<i64: 3, 160, 32>}, {pipeline_mode = #tpu.pipeline_mode<synchronous>, transform_indices = @transform_4, window_bounds = array<i64: 3, 1, 32>}, {pipeline_mode = #tpu.pipeline_mode<synchronous>, transform_indices = @transform_5, window_bounds = array<i64: 3, 1, 32>}, {pipeline_mode = #tpu.pipeline_mode<synchronous>, transform_indices = @transform_6, window_bounds = array<i64: 3, 1, 32>}, {pipeline_mode = #tpu.pipeline_mode<synchronous>, transform_indices = @transform_7, window_bounds = array<i64: 32, 128>}, {pipeline_mode = #tpu.pipeline_mode<synchronous>, transform_indices = @transform_8, window_bounds = array<i64: 1, 128>}, {transform_indices = @transform_9, window_bounds = array<i64: 2, 8, 2, 64>}]} {
    %c0 = arith.constant 0 : index
    %c0_0 = arith.constant 0 : index
    %0 = vector.load %arg1[%c0, %c0_0] : memref<2x1xi32, #tpu.memory_space<vmem>>, vector<2x1xi32>
    %1 = vector.shape_cast %0 : vector<2x1xi32> to vector<2x1x1xi32>
    %2 = tpu.iota {dimensions = array<i32: 1>} : vector<2x8x1xi32>
    %3 = vector.broadcast %1 : vector<2x1x1xi32> to vector<2x8x1xi32>
    %4 = arith.cmpi slt, %2, %3 : vector<2x8x1xi32>
    %5 = vector.shape_cast %4 : vector<2x8x1xi1> to vector<16x1xi1>
    %c0_1 = arith.constant 0 : index
    %c0_2 = arith.constant 0 : index
    %c0_3 = arith.constant 0 : index
    %6 = vector.load %arg2[%c0_1, %c0_2, %c0_3] : memref<2x8x1xi32, #tpu.memory_space<vmem>>, vector<2x8x1xi32>
    %7 = vector.shape_cast %6 : vector<2x8x1xi32> to vector<16x1xi32>
    %8 = tpu.iota {dimensions = array<i32: 1>} : vector<16x40xi32>
    %9 = vector.broadcast %7 : vector<16x1xi32> to vector<16x40xi32>
    %10 = arith.cmpi eq, %8, %9 : vector<16x40xi32>
    %11 = arith.extui %10 : vector<16x40xi1> to vector<16x40xi32>
    %12 = arith.sitofp %11 : vector<16x40xi32> to vector<16x40xf32>
    %13 = arith.truncf %12 : vector<16x40xf32> to vector<16x40xbf16>
    %c0_4 = arith.constant 0 : index
    %c0_5 = arith.constant 0 : index
    %14 = vector.load %arg3[%c0_4, %c0_5] : memref<40x32xbf16, #tpu.memory_space<vmem>>, vector<40x32xbf16>
    %cst = arith.constant dense<0.000000e+00> : vector<16x32xf32>
    %15 = tpu.matmul %13, %14, %cst {dimension_numbers = #tpu.dot_dimension_numbers<[1], [0], [0], [1], [0, 0, 1, 1], [], []>} : vector<16x40xbf16>, vector<40x32xbf16>, vector<16x32xf32> -> vector<16x32xf32>
    %cst_6 = arith.constant 0.000000e+00 : f32
    %16 = vector.shape_cast %5 : vector<16x1xi1> to vector<16x1xi1>
    %17 = vector.broadcast %16 : vector<16x1xi1> to vector<16x32xi1>
    %18 = vector.broadcast %cst_6 : f32 to vector<16x32xf32>
    %19 = arith.select %17, %15, %18 : vector<16x32xi1>, vector<16x32xf32>
    %cst_7 = arith.constant 0.000000e+00 : bf16
    %20 = vector.broadcast %cst_7 : bf16 to vector<2x2x32xbf16>
    %c0_8 = arith.constant 0 : index
    %c0_9 = arith.constant 0 : index
    %c0_10 = arith.constant 0 : index
    %21 = vector.load %arg11[%c0_8, %c0_9, %c0_10] : memref<2x12x32xbf16, #tpu.memory_space<vmem>>, vector<2x2x32xbf16>
    tpu.vector_store %arg11[%c0_8, %c0_9, %c0_10], %20 {strides = array<i32>} : memref<2x12x32xbf16, #tpu.memory_space<vmem>>, vector<2x2x32xbf16>,
    %cst_11 = arith.constant 0.000000e+00 : bf16
    %22 = vector.broadcast %cst_11 : bf16 to vector<2x2x32xbf16>
    %c0_12 = arith.constant 0 : index
    %c10 = arith.constant 10 : index
    %c0_13 = arith.constant 0 : index
    %23 = vector.load %arg11[%c0_12, %c10, %c0_13] : memref<2x12x32xbf16, #tpu.memory_space<vmem>>, vector<2x2x32xbf16>
    tpu.vector_store %arg11[%c0_12, %c10, %c0_13], %22 {strides = array<i32>} : memref<2x12x32xbf16, #tpu.memory_space<vmem>>, vector<2x2x32xbf16>,
    %24 = vector.shape_cast %19 : vector<16x32xf32> to vector<2x8x32xf32>
    %25 = arith.truncf %24 : vector<2x8x32xf32> to vector<2x8x32xbf16>
    %c0_14 = arith.constant 0 : index
    %c2 = arith.constant 2 : index
    %c0_15 = arith.constant 0 : index
    %26 = vector.load %arg11[%c0_14, %c2, %c0_15] : memref<2x12x32xbf16, #tpu.memory_space<vmem>>, vector<2x8x32xbf16>
    tpu.vector_store %arg11[%c0_14, %c2, %c0_15], %25 {strides = array<i32>} : memref<2x12x32xbf16, #tpu.memory_space<vmem>>, vector<2x8x32xbf16>,
    %c0_16 = arith.constant 0 : index
    %c0_17 = arith.constant 0 : index
    %c0_18 = arith.constant 0 : index
    %27 = vector.load %arg11[%c0_16, %c0_17, %c0_18] : memref<2x12x32xbf16, #tpu.memory_space<vmem>>, vector<2x12x32xbf16>
    %28 = vector.extract_strided_slice %27 {offsets = [0, 0, 0], sizes = [2, 8, 32], strides = [1, 1, 1]} : vector<2x12x32xbf16> to vector<2x8x32xbf16>
    %29 = vector.shape_cast %28 : vector<2x8x32xbf16> to vector<16x32xbf16>
    %30 = vector.extract_strided_slice %27 {offsets = [0, 1, 0], sizes = [2, 8, 32], strides = [1, 1, 1]} : vector<2x12x32xbf16> to vector<2x8x32xbf16>
    %31 = vector.shape_cast %30 : vector<2x8x32xbf16> to vector<16x32xbf16>
    %32 = vector.extract_strided_slice %27 {offsets = [0, 2, 0], sizes = [2, 8, 32], strides = [1, 1, 1]} : vector<2x12x32xbf16> to vector<2x8x32xbf16>
    %33 = vector.shape_cast %32 : vector<2x8x32xbf16> to vector<16x32xbf16>
    %34 = vector.extract_strided_slice %27 {offsets = [0, 3, 0], sizes = [2, 8, 32], strides = [1, 1, 1]} : vector<2x12x32xbf16> to vector<2x8x32xbf16>
    %35 = vector.shape_cast %34 : vector<2x8x32xbf16> to vector<16x32xbf16>
    %36 = vector.extract_strided_slice %27 {offsets = [0, 4, 0], sizes = [2, 8, 32], strides = [1, 1, 1]} : vector<2x12x32xbf16> to vector<2x8x32xbf16>
    %37 = vector.shape_cast %36 : vector<2x8x32xbf16> to vector<16x32xbf16>
    %38 = tpu.concatenate %29, %31, %33, %35, %37 in 1 : vector<16x32xbf16>, vector<16x32xbf16>, vector<16x32xbf16>, vector<16x32xbf16>, vector<16x32xbf16> -> vector<16x160xbf16>
    %c0_19 = arith.constant 0 : index
    %c0_20 = arith.constant 0 : index
    %c0_21 = arith.constant 0 : index
    %39 = vector.load %arg4[%c0_19, %c0_20, %c0_21] : memref<3x160x32xbf16, #tpu.memory_space<vmem>>, vector<1x160x32xbf16>
    %40 = vector.shape_cast %39 : vector<1x160x32xbf16> to vector<160x32xbf16>
    %cst_22 = arith.constant dense<0.000000e+00> : vector<16x32xf32>
    %41 = tpu.matmul %38, %40, %cst_22 {dimension_numbers = #tpu.dot_dimension_numbers<[1], [0], [0], [1], [0, 0, 1, 1], [], []>} : vector<16x160xbf16>, vector<160x32xbf16>, vector<16x32xf32> -> vector<16x32xf32>
    %c0_23 = arith.constant 0 : index
    %c0_24 = arith.constant 0 : index
    %c0_25 = arith.constant 0 : index
    %42 = vector.load %arg5[%c0_23, %c0_24, %c0_25] : memref<3x1x32xf32, #tpu.memory_space<vmem>>, vector<1x1x32xf32>
    %43 = vector.shape_cast %42 : vector<1x1x32xf32> to vector<1x32xf32>
    %44 = vector.broadcast %43 : vector<1x32xf32> to vector<16x32xf32>
    %45 = arith.addf %41, %44 : vector<16x32xf32>
    %cst_26 = arith.constant dense<0.000000e+00> : vector<16xf32>
    %46 = vector.multi_reduction <add>, %45, %cst_26 [1] : vector<16x32xf32> to vector<16xf32>
    %47 = vector.shape_cast %46 : vector<16xf32> to vector<16x1xf32>
    %cst_27 = arith.constant 3.200000e+01 : f32
    %48 = vector.broadcast %cst_27 : f32 to vector<16x1xf32>
    %49 = arith.divf %47, %48 : vector<16x1xf32>
    %50 = vector.broadcast %49 : vector<16x1xf32> to vector<16x32xf32>
    %51 = arith.subf %45, %50 : vector<16x32xf32>
    %52 = arith.mulf %51, %51 : vector<16x32xf32>
    %cst_28 = arith.constant dense<0.000000e+00> : vector<16xf32>
    %53 = vector.multi_reduction <add>, %52, %cst_28 [1] : vector<16x32xf32> to vector<16xf32>
    %54 = vector.shape_cast %53 : vector<16xf32> to vector<16x1xf32>
    %cst_29 = arith.constant 3.200000e+01 : f32
    %55 = vector.broadcast %cst_29 : f32 to vector<16x1xf32>
    %56 = arith.divf %54, %55 : vector<16x1xf32>
    %57 = vector.broadcast %49 : vector<16x1xf32> to vector<16x32xf32>
    %58 = arith.subf %45, %57 : vector<16x32xf32>
    %cst_30 = arith.constant 9.99999974E-6 : f32
    %59 = vector.broadcast %cst_30 : f32 to vector<16x1xf32>
    %60 = arith.addf %56, %59 : vector<16x1xf32>
    %61 = math.rsqrt %60 : vector<16x1xf32>
    %62 = vector.broadcast %61 : vector<16x1xf32> to vector<16x32xf32>
    %63 = arith.mulf %58, %62 : vector<16x32xf32>
    %c0_31 = arith.constant 0 : index
    %c0_32 = arith.constant 0 : index
    %c0_33 = arith.constant 0 : index
    %64 = vector.load %arg6[%c0_31, %c0_32, %c0_33] : memref<3x1x32xf32, #tpu.memory_space<vmem>>, vector<1x1x32xf32>
    %65 = vector.shape_cast %64 : vector<1x1x32xf32> to vector<1x32xf32>
    %66 = vector.broadcast %65 : vector<1x32xf32> to vector<16x32xf32>
    %67 = arith.mulf %63, %66 : vector<16x32xf32>
    %c0_34 = arith.constant 0 : index
    %c0_35 = arith.constant 0 : index
    %c0_36 = arith.constant 0 : index
    %68 = vector.load %arg7[%c0_34, %c0_35, %c0_36] : memref<3x1x32xf32, #tpu.memory_space<vmem>>, vector<1x1x32xf32>
    %69 = vector.shape_cast %68 : vector<1x1x32xf32> to vector<1x32xf32>
    %70 = vector.broadcast %69 : vector<1x32xf32> to vector<16x32xf32>
    %71 = arith.addf %67, %70 : vector<16x32xf32>
    %cst_37 = arith.constant 0.000000e+00 : f32
    %72 = vector.broadcast %cst_37 : f32 to vector<16x32xf32>
    %73 = arith.cmpf oge, %71, %72 : vector<16x32xf32>
    %cst_38 = arith.constant 2.000000e-01 : f32
    %74 = vector.broadcast %cst_38 : f32 to vector<16x32xf32>
    %75 = arith.mulf %74, %71 : vector<16x32xf32>
    %76 = arith.select %73, %71, %75 : vector<16x32xi1>, vector<16x32xf32>
    %cst_39 = arith.constant 0.000000e+00 : f32
    %77 = vector.shape_cast %5 : vector<16x1xi1> to vector<16x1xi1>
    %78 = vector.broadcast %77 : vector<16x1xi1> to vector<16x32xi1>
    %79 = vector.broadcast %cst_39 : f32 to vector<16x32xf32>
    %80 = arith.select %78, %76, %79 : vector<16x32xi1>, vector<16x32xf32>
    %81 = vector.shape_cast %80 : vector<16x32xf32> to vector<2x8x32xf32>
    %82 = arith.truncf %81 : vector<2x8x32xf32> to vector<2x8x32xbf16>
    %c0_40 = arith.constant 0 : index
    %c2_41 = arith.constant 2 : index
    %c0_42 = arith.constant 0 : index
    %83 = vector.load %arg11[%c0_40, %c2_41, %c0_42] : memref<2x12x32xbf16, #tpu.memory_space<vmem>>, vector<2x8x32xbf16>
    tpu.vector_store %arg11[%c0_40, %c2_41, %c0_42], %82 {strides = array<i32>} : memref<2x12x32xbf16, #tpu.memory_space<vmem>>, vector<2x8x32xbf16>,
    %c0_43 = arith.constant 0 : index
    %c0_44 = arith.constant 0 : index
    %c0_45 = arith.constant 0 : index
    %84 = vector.load %arg11[%c0_43, %c0_44, %c0_45] : memref<2x12x32xbf16, #tpu.memory_space<vmem>>, vector<2x12x32xbf16>
    %85 = vector.extract_strided_slice %84 {offsets = [0, 0, 0], sizes = [2, 8, 32], strides = [1, 1, 1]} : vector<2x12x32xbf16> to vector<2x8x32xbf16>
    %86 = vector.shape_cast %85 : vector<2x8x32xbf16> to vector<16x32xbf16>
    %87 = vector.extract_strided_slice %84 {offsets = [0, 1, 0], sizes = [2, 8, 32], strides = [1, 1, 1]} : vector<2x12x32xbf16> to vector<2x8x32xbf16>
    %88 = vector.shape_cast %87 : vector<2x8x32xbf16> to vector<16x32xbf16>
    %89 = vector.extract_strided_slice %84 {offsets = [0, 2, 0], sizes = [2, 8, 32], strides = [1, 1, 1]} : vector<2x12x32xbf16> to vector<2x8x32xbf16>
    %90 = vector.shape_cast %89 : vector<2x8x32xbf16> to vector<16x32xbf16>
    %91 = vector.extract_strided_slice %84 {offsets = [0, 3, 0], sizes = [2, 8, 32], strides = [1, 1, 1]} : vector<2x12x32xbf16> to vector<2x8x32xbf16>
    %92 = vector.shape_cast %91 : vector<2x8x32xbf16> to vector<16x32xbf16>
    %93 = vector.extract_strided_slice %84 {offsets = [0, 4, 0], sizes = [2, 8, 32], strides = [1, 1, 1]} : vector<2x12x32xbf16> to vector<2x8x32xbf16>
    %94 = vector.shape_cast %93 : vector<2x8x32xbf16> to vector<16x32xbf16>
    %95 = tpu.concatenate %86, %88, %90, %92, %94 in 1 : vector<16x32xbf16>, vector<16x32xbf16>, vector<16x32xbf16>, vector<16x32xbf16>, vector<16x32xbf16> -> vector<16x160xbf16>
    %c1 = arith.constant 1 : index
    %c0_46 = arith.constant 0 : index
    %c0_47 = arith.constant 0 : index
    %96 = vector.load %arg4[%c1, %c0_46, %c0_47] : memref<3x160x32xbf16, #tpu.memory_space<vmem>>, vector<1x160x32xbf16>
    %97 = vector.shape_cast %96 : vector<1x160x32xbf16> to vector<160x32xbf16>
    %cst_48 = arith.constant dense<0.000000e+00> : vector<16x32xf32>
    %98 = tpu.matmul %95, %97, %cst_48 {dimension_numbers = #tpu.dot_dimension_numbers<[1], [0], [0], [1], [0, 0, 1, 1], [], []>} : vector<16x160xbf16>, vector<160x32xbf16>, vector<16x32xf32> -> vector<16x32xf32>
    %c1_49 = arith.constant 1 : index
    %c0_50 = arith.constant 0 : index
    %c0_51 = arith.constant 0 : index
    %99 = vector.load %arg5[%c1_49, %c0_50, %c0_51] : memref<3x1x32xf32, #tpu.memory_space<vmem>>, vector<1x1x32xf32>
    %100 = vector.shape_cast %99 : vector<1x1x32xf32> to vector<1x32xf32>
    %101 = vector.broadcast %100 : vector<1x32xf32> to vector<16x32xf32>
    %102 = arith.addf %98, %101 : vector<16x32xf32>
    %cst_52 = arith.constant dense<0.000000e+00> : vector<16xf32>
    %103 = vector.multi_reduction <add>, %102, %cst_52 [1] : vector<16x32xf32> to vector<16xf32>
    %104 = vector.shape_cast %103 : vector<16xf32> to vector<16x1xf32>
    %cst_53 = arith.constant 3.200000e+01 : f32
    %105 = vector.broadcast %cst_53 : f32 to vector<16x1xf32>
    %106 = arith.divf %104, %105 : vector<16x1xf32>
    %107 = vector.broadcast %106 : vector<16x1xf32> to vector<16x32xf32>
    %108 = arith.subf %102, %107 : vector<16x32xf32>
    %109 = arith.mulf %108, %108 : vector<16x32xf32>
    %cst_54 = arith.constant dense<0.000000e+00> : vector<16xf32>
    %110 = vector.multi_reduction <add>, %109, %cst_54 [1] : vector<16x32xf32> to vector<16xf32>
    %111 = vector.shape_cast %110 : vector<16xf32> to vector<16x1xf32>
    %cst_55 = arith.constant 3.200000e+01 : f32
    %112 = vector.broadcast %cst_55 : f32 to vector<16x1xf32>
    %113 = arith.divf %111, %112 : vector<16x1xf32>
    %114 = vector.broadcast %106 : vector<16x1xf32> to vector<16x32xf32>
    %115 = arith.subf %102, %114 : vector<16x32xf32>
    %cst_56 = arith.constant 9.99999974E-6 : f32
    %116 = vector.broadcast %cst_56 : f32 to vector<16x1xf32>
    %117 = arith.addf %113, %116 : vector<16x1xf32>
    %118 = math.rsqrt %117 : vector<16x1xf32>
    %119 = vector.broadcast %118 : vector<16x1xf32> to vector<16x32xf32>
    %120 = arith.mulf %115, %119 : vector<16x32xf32>
    %c1_57 = arith.constant 1 : index
    %c0_58 = arith.constant 0 : index
    %c0_59 = arith.constant 0 : index
    %121 = vector.load %arg6[%c1_57, %c0_58, %c0_59] : memref<3x1x32xf32, #tpu.memory_space<vmem>>, vector<1x1x32xf32>
    %122 = vector.shape_cast %121 : vector<1x1x32xf32> to vector<1x32xf32>
    %123 = vector.broadcast %122 : vector<1x32xf32> to vector<16x32xf32>
    %124 = arith.mulf %120, %123 : vector<16x32xf32>
    %c1_60 = arith.constant 1 : index
    %c0_61 = arith.constant 0 : index
    %c0_62 = arith.constant 0 : index
    %125 = vector.load %arg7[%c1_60, %c0_61, %c0_62] : memref<3x1x32xf32, #tpu.memory_space<vmem>>, vector<1x1x32xf32>
    %126 = vector.shape_cast %125 : vector<1x1x32xf32> to vector<1x32xf32>
    %127 = vector.broadcast %126 : vector<1x32xf32> to vector<16x32xf32>
    %128 = arith.addf %124, %127 : vector<16x32xf32>
    %cst_63 = arith.constant 0.000000e+00 : f32
    %129 = vector.broadcast %cst_63 : f32 to vector<16x32xf32>
    %130 = arith.cmpf oge, %128, %129 : vector<16x32xf32>
    %cst_64 = arith.constant 2.000000e-01 : f32
    %131 = vector.broadcast %cst_64 : f32 to vector<16x32xf32>
    %132 = arith.mulf %131, %128 : vector<16x32xf32>
    %133 = arith.select %130, %128, %132 : vector<16x32xi1>, vector<16x32xf32>
    %cst_65 = arith.constant 0.000000e+00 : f32
    %134 = vector.shape_cast %5 : vector<16x1xi1> to vector<16x1xi1>
    %135 = vector.broadcast %134 : vector<16x1xi1> to vector<16x32xi1>
    %136 = vector.broadcast %cst_65 : f32 to vector<16x32xf32>
    %137 = arith.select %135, %133, %136 : vector<16x32xi1>, vector<16x32xf32>
    %138 = vector.shape_cast %137 : vector<16x32xf32> to vector<2x8x32xf32>
    %139 = arith.truncf %138 : vector<2x8x32xf32> to vector<2x8x32xbf16>
    %c0_66 = arith.constant 0 : index
    %c2_67 = arith.constant 2 : index
    %c0_68 = arith.constant 0 : index
    %140 = vector.load %arg11[%c0_66, %c2_67, %c0_68] : memref<2x12x32xbf16, #tpu.memory_space<vmem>>, vector<2x8x32xbf16>
    tpu.vector_store %arg11[%c0_66, %c2_67, %c0_68], %139 {strides = array<i32>} : memref<2x12x32xbf16, #tpu.memory_space<vmem>>, vector<2x8x32xbf16>,
    %c0_69 = arith.constant 0 : index
    %c0_70 = arith.constant 0 : index
    %c0_71 = arith.constant 0 : index
    %141 = vector.load %arg11[%c0_69, %c0_70, %c0_71] : memref<2x12x32xbf16, #tpu.memory_space<vmem>>, vector<2x12x32xbf16>
    %142 = vector.extract_strided_slice %141 {offsets = [0, 0, 0], sizes = [2, 8, 32], strides = [1, 1, 1]} : vector<2x12x32xbf16> to vector<2x8x32xbf16>
    %143 = vector.shape_cast %142 : vector<2x8x32xbf16> to vector<16x32xbf16>
    %144 = vector.extract_strided_slice %141 {offsets = [0, 1, 0], sizes = [2, 8, 32], strides = [1, 1, 1]} : vector<2x12x32xbf16> to vector<2x8x32xbf16>
    %145 = vector.shape_cast %144 : vector<2x8x32xbf16> to vector<16x32xbf16>
    %146 = vector.extract_strided_slice %141 {offsets = [0, 2, 0], sizes = [2, 8, 32], strides = [1, 1, 1]} : vector<2x12x32xbf16> to vector<2x8x32xbf16>
    %147 = vector.shape_cast %146 : vector<2x8x32xbf16> to vector<16x32xbf16>
    %148 = vector.extract_strided_slice %141 {offsets = [0, 3, 0], sizes = [2, 8, 32], strides = [1, 1, 1]} : vector<2x12x32xbf16> to vector<2x8x32xbf16>
    %149 = vector.shape_cast %148 : vector<2x8x32xbf16> to vector<16x32xbf16>
    %150 = vector.extract_strided_slice %141 {offsets = [0, 4, 0], sizes = [2, 8, 32], strides = [1, 1, 1]} : vector<2x12x32xbf16> to vector<2x8x32xbf16>
    %151 = vector.shape_cast %150 : vector<2x8x32xbf16> to vector<16x32xbf16>
    %152 = tpu.concatenate %143, %145, %147, %149, %151 in 1 : vector<16x32xbf16>, vector<16x32xbf16>, vector<16x32xbf16>, vector<16x32xbf16>, vector<16x32xbf16> -> vector<16x160xbf16>
    %c2_72 = arith.constant 2 : index
    %c0_73 = arith.constant 0 : index
    %c0_74 = arith.constant 0 : index
    %153 = vector.load %arg4[%c2_72, %c0_73, %c0_74] : memref<3x160x32xbf16, #tpu.memory_space<vmem>>, vector<1x160x32xbf16>
    %154 = vector.shape_cast %153 : vector<1x160x32xbf16> to vector<160x32xbf16>
    %cst_75 = arith.constant dense<0.000000e+00> : vector<16x32xf32>
    %155 = tpu.matmul %152, %154, %cst_75 {dimension_numbers = #tpu.dot_dimension_numbers<[1], [0], [0], [1], [0, 0, 1, 1], [], []>} : vector<16x160xbf16>, vector<160x32xbf16>, vector<16x32xf32> -> vector<16x32xf32>
    %c2_76 = arith.constant 2 : index
    %c0_77 = arith.constant 0 : index
    %c0_78 = arith.constant 0 : index
    %156 = vector.load %arg5[%c2_76, %c0_77, %c0_78] : memref<3x1x32xf32, #tpu.memory_space<vmem>>, vector<1x1x32xf32>
    %157 = vector.shape_cast %156 : vector<1x1x32xf32> to vector<1x32xf32>
    %158 = vector.broadcast %157 : vector<1x32xf32> to vector<16x32xf32>
    %159 = arith.addf %155, %158 : vector<16x32xf32>
    %cst_79 = arith.constant dense<0.000000e+00> : vector<16xf32>
    %160 = vector.multi_reduction <add>, %159, %cst_79 [1] : vector<16x32xf32> to vector<16xf32>
    %161 = vector.shape_cast %160 : vector<16xf32> to vector<16x1xf32>
    %cst_80 = arith.constant 3.200000e+01 : f32
    %162 = vector.broadcast %cst_80 : f32 to vector<16x1xf32>
    %163 = arith.divf %161, %162 : vector<16x1xf32>
    %164 = vector.broadcast %163 : vector<16x1xf32> to vector<16x32xf32>
    %165 = arith.subf %159, %164 : vector<16x32xf32>
    %166 = arith.mulf %165, %165 : vector<16x32xf32>
    %cst_81 = arith.constant dense<0.000000e+00> : vector<16xf32>
    %167 = vector.multi_reduction <add>, %166, %cst_81 [1] : vector<16x32xf32> to vector<16xf32>
    %168 = vector.shape_cast %167 : vector<16xf32> to vector<16x1xf32>
    %cst_82 = arith.constant 3.200000e+01 : f32
    %169 = vector.broadcast %cst_82 : f32 to vector<16x1xf32>
    %170 = arith.divf %168, %169 : vector<16x1xf32>
    %171 = vector.broadcast %163 : vector<16x1xf32> to vector<16x32xf32>
    %172 = arith.subf %159, %171 : vector<16x32xf32>
    %cst_83 = arith.constant 9.99999974E-6 : f32
    %173 = vector.broadcast %cst_83 : f32 to vector<16x1xf32>
    %174 = arith.addf %170, %173 : vector<16x1xf32>
    %175 = math.rsqrt %174 : vector<16x1xf32>
    %176 = vector.broadcast %175 : vector<16x1xf32> to vector<16x32xf32>
    %177 = arith.mulf %172, %176 : vector<16x32xf32>
    %c2_84 = arith.constant 2 : index
    %c0_85 = arith.constant 0 : index
    %c0_86 = arith.constant 0 : index
    %178 = vector.load %arg6[%c2_84, %c0_85, %c0_86] : memref<3x1x32xf32, #tpu.memory_space<vmem>>, vector<1x1x32xf32>
    %179 = vector.shape_cast %178 : vector<1x1x32xf32> to vector<1x32xf32>
    %180 = vector.broadcast %179 : vector<1x32xf32> to vector<16x32xf32>
    %181 = arith.mulf %177, %180 : vector<16x32xf32>
    %c2_87 = arith.constant 2 : index
    %c0_88 = arith.constant 0 : index
    %c0_89 = arith.constant 0 : index
    %182 = vector.load %arg7[%c2_87, %c0_88, %c0_89] : memref<3x1x32xf32, #tpu.memory_space<vmem>>, vector<1x1x32xf32>
    %183 = vector.shape_cast %182 : vector<1x1x32xf32> to vector<1x32xf32>
    %184 = vector.broadcast %183 : vector<1x32xf32> to vector<16x32xf32>
    %185 = arith.addf %181, %184 : vector<16x32xf32>
    %cst_90 = arith.constant 0.000000e+00 : f32
    %186 = vector.broadcast %cst_90 : f32 to vector<16x32xf32>
    %187 = arith.cmpf oge, %185, %186 : vector<16x32xf32>
    %cst_91 = arith.constant 2.000000e-01 : f32
    %188 = vector.broadcast %cst_91 : f32 to vector<16x32xf32>
    %189 = arith.mulf %188, %185 : vector<16x32xf32>
    %190 = arith.select %187, %185, %189 : vector<16x32xi1>, vector<16x32xf32>
    %cst_92 = arith.constant 0.000000e+00 : f32
    %191 = vector.shape_cast %5 : vector<16x1xi1> to vector<16x1xi1>
    %192 = vector.broadcast %191 : vector<16x1xi1> to vector<16x32xi1>
    %193 = vector.broadcast %cst_92 : f32 to vector<16x32xf32>
    %194 = arith.select %192, %190, %193 : vector<16x32xi1>, vector<16x32xf32>
    %195 = arith.truncf %194 : vector<16x32xf32> to vector<16x32xbf16>
    %c0_93 = arith.constant 0 : index
    %c0_94 = arith.constant 0 : index
    %196 = vector.load %arg8[%c0_93, %c0_94] : memref<32x128xbf16, #tpu.memory_space<vmem>>, vector<32x128xbf16>
    %cst_95 = arith.constant dense<0.000000e+00> : vector<16x128xf32>
    %197 = tpu.matmul %195, %196, %cst_95 {dimension_numbers = #tpu.dot_dimension_numbers<[1], [0], [0], [1], [0, 0, 1, 1], [], []>} : vector<16x32xbf16>, vector<32x128xbf16>, vector<16x128xf32> -> vector<16x128xf32>
    %c0_96 = arith.constant 0 : index
    %c0_97 = arith.constant 0 : index
    %198 = vector.load %arg9[%c0_96, %c0_97] : memref<1x128xf32, #tpu.memory_space<vmem>>, vector<1x128xf32>
    %199 = vector.broadcast %198 : vector<1x128xf32> to vector<16x128xf32>
    %200 = arith.addf %197, %199 : vector<16x128xf32>
    %201 = vector.extract_strided_slice %200 {offsets = [0, 0], sizes = [16, 64], strides = [1, 1]} : vector<16x128xf32> to vector<16x64xf32>
    %202 = vector.shape_cast %201 : vector<16x64xf32> to vector<2x8x64xf32>
    %203 = tpu.transpose %202, [1, 0, 2] : vector<2x8x64xf32> -> vector<8x2x64xf32>
    %204 = arith.truncf %203 : vector<8x2x64xf32> to vector<8x2x64xbf16>
    %c0_98 = arith.constant 0 : index
    %c0_99 = arith.constant 0 : index
    %c0_100 = arith.constant 0 : index
    %c0_101 = arith.constant 0 : index
    %205 = vector.load %arg10[%c0_98, %c0_99, %c0_100, %c0_101] : memref<2x8x2x64xbf16, #tpu.memory_space<vmem>>, vector<1x8x2x64xbf16>
    %206 = vector.shape_cast %205 : vector<1x8x2x64xbf16> to vector<8x2x64xbf16>
    %207 = vector.shape_cast %204 : vector<8x2x64xbf16> to vector<1x8x2x64xbf16>
    tpu.vector_store %arg10[%c0_98, %c0_99, %c0_100, %c0_101], %207 {strides = array<i32>} : memref<2x8x2x64xbf16, #tpu.memory_space<vmem>>, vector<1x8x2x64xbf16>,
    %208 = vector.extract_strided_slice %200 {offsets = [0, 64], sizes = [16, 64], strides = [1, 1]} : vector<16x128xf32> to vector<16x64xf32>
    %209 = vector.shape_cast %208 : vector<16x64xf32> to vector<2x8x64xf32>
    %210 = tpu.transpose %209, [1, 0, 2] : vector<2x8x64xf32> -> vector<8x2x64xf32>
    %211 = arith.truncf %210 : vector<8x2x64xf32> to vector<8x2x64xbf16>
    %c1_102 = arith.constant 1 : index
    %c0_103 = arith.constant 0 : index
    %c0_104 = arith.constant 0 : index
    %c0_105 = arith.constant 0 : index
    %212 = vector.load %arg10[%c1_102, %c0_103, %c0_104, %c0_105] : memref<2x8x2x64xbf16, #tpu.memory_space<vmem>>, vector<1x8x2x64xbf16>
    %213 = vector.shape_cast %212 : vector<1x8x2x64xbf16> to vector<8x2x64xbf16>
    %214 = vector.shape_cast %211 : vector<8x2x64xbf16> to vector<1x8x2x64xbf16>
    tpu.vector_store %arg10[%c1_102, %c0_103, %c0_104, %c0_105], %214 {strides = array<i32>} : memref<2x8x2x64xbf16, #tpu.memory_space<vmem>>, vector<1x8x2x64xbf16>,
    return
  }
  func.func @transform_0(%arg0: i32) -> (i32, i32) {
    %c0_i32 = arith.constant 0 : i32
    %c0_i32_0 = arith.constant 0 : i32
    return %arg0, %c0_i32 : i32, i32
  }
  func.func @transform_1(%arg0: i32) -> (i32, i32, i32) {
    %c0_i32 = arith.constant 0 : i32
    %c0_i32_0 = arith.constant 0 : i32
    %c0_i32_1 = arith.constant 0 : i32
    return %arg0, %c0_i32, %c0_i32_0 : i32, i32, i32
  }
  func.func @transform_2(%arg0: i32) -> (i32, i32) {
    %c0_i32 = arith.constant 0 : i32
    %c0_i32_0 = arith.constant 0 : i32
    %c0_i32_1 = arith.constant 0 : i32
    return %c0_i32, %c0_i32_0 : i32, i32
  }
  func.func @transform_3(%arg0: i32) -> (i32, i32, i32) {
    %c0_i32 = arith.constant 0 : i32
    %c0_i32_0 = arith.constant 0 : i32
    %c0_i32_1 = arith.constant 0 : i32
    %c0_i32_2 = arith.constant 0 : i32
    return %c0_i32, %c0_i32_0, %c0_i32_1 : i32, i32, i32
  }
  func.func @transform_4(%arg0: i32) -> (i32, i32, i32) {
    %c0_i32 = arith.constant 0 : i32
    %c0_i32_0 = arith.constant 0 : i32
    %c0_i32_1 = arith.constant 0 : i32
    %c0_i32_2 = arith.constant 0 : i32
    return %c0_i32, %c0_i32_0, %c0_i32_1 : i32, i32, i32
  }
  func.func @transform_5(%arg0: i32) -> (i32, i32, i32) {
    %c0_i32 = arith.constant 0 : i32
    %c0_i32_0 = arith.constant 0 : i32
    %c0_i32_1 = arith.constant 0 : i32
    %c0_i32_2 = arith.constant 0 : i32
    return %c0_i32, %c0_i32_0, %c0_i32_1 : i32, i32, i32
  }
  func.func @transform_6(%arg0: i32) -> (i32, i32, i32) {
    %c0_i32 = arith.constant 0 : i32
    %c0_i32_0 = arith.constant 0 : i32
    %c0_i32_1 = arith.constant 0 : i32
    %c0_i32_2 = arith.constant 0 : i32
    return %c0_i32, %c0_i32_0, %c0_i32_1 : i32, i32, i32
  }
  func.func @transform_7(%arg0: i32) -> (i32, i32) {
    %c0_i32 = arith.constant 0 : i32
    %c0_i32_0 = arith.constant 0 : i32
    %c0_i32_1 = arith.constant 0 : i32
    return %c0_i32, %c0_i32_0 : i32, i32
  }
  func.func @transform_8(%arg0: i32) -> (i32, i32) {
    %c0_i32 = arith.constant 0 : i32
    %c0_i32_0 = arith.constant 0 : i32
    %c0_i32_1 = arith.constant 0 : i32
    return %c0_i32, %c0_i32_0 : i32, i32
  }
  func.func @transform_9(%arg0: i32) -> (i32, i32, i32, i32) {
    %c0_i32 = arith.constant 0 : i32
    %c0_i32_0 = arith.constant 0 : i32
    %c0_i32_1 = arith.constant 0 : i32
    %c0_i32_2 = arith.constant 0 : i32
    return %c0_i32, %c0_i32_0, %arg0, %c0_i32_1 : i32, i32, i32, i32
  }
}

module attributes {stable_mosaic.version = 11 : i64} {
  func.func @_bilstm_kernel(%arg0: i32, %arg1: memref<1x8x2x64xbf16, #tpu.memory_space<vmem>>, %arg2: memref<1x8x2x64xbf16, #tpu.memory_space<vmem>>, %arg3: memref<32x128xbf16, #tpu.memory_space<vmem>>, %arg4: memref<2x1xi32, #tpu.memory_space<vmem>>, %arg5: memref<8x2x16xf32, #tpu.memory_space<vmem>>, %arg6: memref<8x2x16xf32, #tpu.memory_space<vmem>>, %arg7: memref<2x16xf32, #tpu.memory_space<vmem>>, %arg8: memref<2x16xf32, #tpu.memory_space<vmem>>, %arg9: memref<2x16xf32, #tpu.memory_space<vmem>>, %arg10: memref<2x16xf32, #tpu.memory_space<vmem>>) attributes {dimension_semantics = [#tpu.dimension_semantics<arbitrary>], iteration_bounds = array<i64: 1>, scalar_prefetch = 0 : i64, scratch_operands = 4 : i64, tpu.core_type = #tpu.core_type<tc>, window_params = [{transform_indices = @transform_0, window_bounds = array<i64: 1, 8, 2, 64>}, {transform_indices = @transform_1, window_bounds = array<i64: 1, 8, 2, 64>}, {pipeline_mode = #tpu.pipeline_mode<synchronous>, transform_indices = @transform_2, window_bounds = array<i64: 32, 128>}, {pipeline_mode = #tpu.pipeline_mode<synchronous>, transform_indices = @transform_3, window_bounds = array<i64: 2, 1>}, {transform_indices = @transform_4, window_bounds = array<i64: 8, 2, 16>}, {transform_indices = @transform_5, window_bounds = array<i64: 8, 2, 16>}]} {
    %c0_i32 = arith.constant 0 : i32
    %0 = arith.cmpi eq, %arg0, %c0_i32 : i32
    %1 = arith.extui %0 : i1 to i32
    %c0_i32_0 = arith.constant 0 : i32
    %2 = arith.cmpi ne, %1, %c0_i32_0 : i32
    scf.if %2 {
      %cst = arith.constant 0.000000e+00 : f32
      %16 = vector.broadcast %cst : f32 to vector<2x16xf32>
      %c0_23 = arith.constant 0 : index
      %c0_24 = arith.constant 0 : index
      %17 = vector.load %arg7[%c0_23, %c0_24] : memref<2x16xf32, #tpu.memory_space<vmem>>, vector<2x16xf32>
      tpu.vector_store %arg7[%c0_23, %c0_24], %16 {strides = array<i32>} : memref<2x16xf32, #tpu.memory_space<vmem>>, vector<2x16xf32>,
      %c0_25 = arith.constant 0 : index
      %c0_26 = arith.constant 0 : index
      %18 = vector.load %arg8[%c0_25, %c0_26] : memref<2x16xf32, #tpu.memory_space<vmem>>, vector<2x16xf32>
      tpu.vector_store %arg8[%c0_25, %c0_26], %16 {strides = array<i32>} : memref<2x16xf32, #tpu.memory_space<vmem>>, vector<2x16xf32>,
      %c0_27 = arith.constant 0 : index
      %c0_28 = arith.constant 0 : index
      %19 = vector.load %arg9[%c0_27, %c0_28] : memref<2x16xf32, #tpu.memory_space<vmem>>, vector<2x16xf32>
      tpu.vector_store %arg9[%c0_27, %c0_28], %16 {strides = array<i32>} : memref<2x16xf32, #tpu.memory_space<vmem>>, vector<2x16xf32>,
      %c0_29 = arith.constant 0 : index
      %c0_30 = arith.constant 0 : index
      %20 = vector.load %arg10[%c0_29, %c0_30] : memref<2x16xf32, #tpu.memory_space<vmem>>, vector<2x16xf32>
      tpu.vector_store %arg10[%c0_29, %c0_30], %16 {strides = array<i32>} : memref<2x16xf32, #tpu.memory_space<vmem>>, vector<2x16xf32>,
    } else {
    }
    %c0 = arith.constant 0 : index
    %c0_1 = arith.constant 0 : index
    %3 = vector.load %arg3[%c0, %c0_1] : memref<32x128xbf16, #tpu.memory_space<vmem>>, vector<32x128xbf16>
    %c0_2 = arith.constant 0 : index
    %c0_3 = arith.constant 0 : index
    %4 = vector.load %arg4[%c0_2, %c0_3] : memref<2x1xi32, #tpu.memory_space<vmem>>, vector<2x1xi32>
    %c8_i32 = arith.constant 8 : i32
    %5 = arith.muli %arg0, %c8_i32 : i32
    %c0_4 = arith.constant 0 : index
    %c0_5 = arith.constant 0 : index
    %6 = vector.load %arg7[%c0_4, %c0_5] : memref<2x16xf32, #tpu.memory_space<vmem>>, vector<2x16xf32>
    %c0_6 = arith.constant 0 : index
    %c0_7 = arith.constant 0 : index
    %7 = vector.load %arg8[%c0_6, %c0_7] : memref<2x16xf32, #tpu.memory_space<vmem>>, vector<2x16xf32>
    %c0_8 = arith.constant 0 : index
    %c0_9 = arith.constant 0 : index
    %8 = vector.load %arg9[%c0_8, %c0_9] : memref<2x16xf32, #tpu.memory_space<vmem>>, vector<2x16xf32>
    %c0_10 = arith.constant 0 : index
    %c0_11 = arith.constant 0 : index
    %9 = vector.load %arg10[%c0_10, %c0_11] : memref<2x16xf32, #tpu.memory_space<vmem>>, vector<2x16xf32>
    %c0_i32_12 = arith.constant 0 : i32
    %c8_i32_13 = arith.constant 8 : i32
    %10 = arith.addi %c0_i32_12, %c8_i32_13 : i32
    %c1_i32 = arith.constant 1 : i32
    %11:4 = scf.for %arg11 = %c0_i32_12 to %10 step %c1_i32 iter_args(%arg12 = %6, %arg13 = %7, %arg14 = %8, %arg15 = %9) -> (vector<2x16xf32>, vector<2x16xf32>, vector<2x16xf32>, vector<2x16xf32>)  : i32 {
      %16 = arith.addi %5, %arg11 : i32
      %c7_i32 = arith.constant 7 : i32
      %17 = arith.subi %c7_i32, %16 : i32
      %c7_i32_23 = arith.constant 7 : i32
      %18 = arith.subi %c7_i32_23, %arg11 : i32
      %c0_24 = arith.constant 0 : index
      %19 = arith.index_cast %arg11 : i32 to index
      %c0_25 = arith.constant 0 : index
      %c0_26 = arith.constant 0 : index
      %20 = vector.load %arg1[%c0_24, %19, %c0_25, %c0_26] : memref<1x8x2x64xbf16, #tpu.memory_space<vmem>>, vector<1x1x2x64xbf16>
      %21 = vector.shape_cast %20 : vector<1x1x2x64xbf16> to vector<1x2x64xbf16>
      %22 = vector.shape_cast %21 : vector<1x2x64xbf16> to vector<2x64xbf16>
      %23 = arith.extf %22 : vector<2x64xbf16> to vector<2x64xf32>
      %c0_27 = arith.constant 0 : index
      %24 = arith.index_cast %18 : i32 to index
      %c0_28 = arith.constant 0 : index
      %c0_29 = arith.constant 0 : index
      %25 = vector.load %arg2[%c0_27, %24, %c0_28, %c0_29] : memref<1x8x2x64xbf16, #tpu.memory_space<vmem>>, vector<1x1x2x64xbf16>
      %26 = vector.shape_cast %25 : vector<1x1x2x64xbf16> to vector<1x2x64xbf16>
      %27 = vector.shape_cast %26 : vector<1x2x64xbf16> to vector<2x64xbf16>
      %28 = arith.extf %27 : vector<2x64xbf16> to vector<2x64xf32>
      %29 = tpu.concatenate %arg12, %arg14 in 1 : vector<2x16xf32>, vector<2x16xf32> -> vector<2x32xf32>
      %30 = arith.truncf %29 : vector<2x32xf32> to vector<2x32xbf16>
      %cst = arith.constant dense<0.000000e+00> : vector<2x128xf32>
      %31 = tpu.matmul %30, %3, %cst {dimension_numbers = #tpu.dot_dimension_numbers<[1], [0], [0], [1], [0, 0, 1, 1], [], []>} : vector<2x32xbf16>, vector<32x128xbf16>, vector<2x128xf32> -> vector<2x128xf32>
      %32 = vector.extract_strided_slice %31 {offsets = [0, 0], sizes = [2, 64], strides = [1, 1]} : vector<2x128xf32> to vector<2x64xf32>
      %33 = arith.addf %23, %32 : vector<2x64xf32>
      %34 = vector.extract_strided_slice %33 {offsets = [0, 0], sizes = [2, 16], strides = [1, 1]} : vector<2x64xf32> to vector<2x16xf32>
      %35 = arith.negf %34 : vector<2x16xf32>
      %36 = math.exp %35 : vector<2x16xf32>
      %cst_30 = arith.constant 1.000000e+00 : f32
      %37 = vector.broadcast %cst_30 : f32 to vector<2x16xf32>
      %38 = arith.addf %37, %36 : vector<2x16xf32>
      %39 = arith.divf %37, %38 : vector<2x16xf32>
      %40 = vector.extract_strided_slice %33 {offsets = [0, 16], sizes = [2, 16], strides = [1, 1]} : vector<2x64xf32> to vector<2x16xf32>
      %41 = arith.negf %40 : vector<2x16xf32>
      %42 = math.exp %41 : vector<2x16xf32>
      %cst_31 = arith.constant 1.000000e+00 : f32
      %43 = vector.broadcast %cst_31 : f32 to vector<2x16xf32>
      %44 = arith.addf %43, %42 : vector<2x16xf32>
      %45 = arith.divf %43, %44 : vector<2x16xf32>
      %46 = vector.extract_strided_slice %33 {offsets = [0, 32], sizes = [2, 16], strides = [1, 1]} : vector<2x64xf32> to vector<2x16xf32>
      %47 = math.tanh %46 : vector<2x16xf32>
      %48 = vector.extract_strided_slice %33 {offsets = [0, 48], sizes = [2, 16], strides = [1, 1]} : vector<2x64xf32> to vector<2x16xf32>
      %49 = arith.negf %48 : vector<2x16xf32>
      %50 = math.exp %49 : vector<2x16xf32>
      %cst_32 = arith.constant 1.000000e+00 : f32
      %51 = vector.broadcast %cst_32 : f32 to vector<2x16xf32>
      %52 = arith.addf %51, %50 : vector<2x16xf32>
      %53 = arith.divf %51, %52 : vector<2x16xf32>
      %54 = arith.mulf %45, %arg13 : vector<2x16xf32>
      %55 = arith.mulf %39, %47 : vector<2x16xf32>
      %56 = arith.addf %54, %55 : vector<2x16xf32>
      %57 = math.tanh %56 : vector<2x16xf32>
      %58 = arith.mulf %53, %57 : vector<2x16xf32>
      %59 = vector.extract_strided_slice %31 {offsets = [0, 64], sizes = [2, 64], strides = [1, 1]} : vector<2x128xf32> to vector<2x64xf32>
      %60 = arith.addf %28, %59 : vector<2x64xf32>
      %61 = vector.extract_strided_slice %60 {offsets = [0, 0], sizes = [2, 16], strides = [1, 1]} : vector<2x64xf32> to vector<2x16xf32>
      %62 = arith.negf %61 : vector<2x16xf32>
      %63 = math.exp %62 : vector<2x16xf32>
      %cst_33 = arith.constant 1.000000e+00 : f32
      %64 = vector.broadcast %cst_33 : f32 to vector<2x16xf32>
      %65 = arith.addf %64, %63 : vector<2x16xf32>
      %66 = arith.divf %64, %65 : vector<2x16xf32>
      %67 = vector.extract_strided_slice %60 {offsets = [0, 16], sizes = [2, 16], strides = [1, 1]} : vector<2x64xf32> to vector<2x16xf32>
      %68 = arith.negf %67 : vector<2x16xf32>
      %69 = math.exp %68 : vector<2x16xf32>
      %cst_34 = arith.constant 1.000000e+00 : f32
      %70 = vector.broadcast %cst_34 : f32 to vector<2x16xf32>
      %71 = arith.addf %70, %69 : vector<2x16xf32>
      %72 = arith.divf %70, %71 : vector<2x16xf32>
      %73 = vector.extract_strided_slice %60 {offsets = [0, 32], sizes = [2, 16], strides = [1, 1]} : vector<2x64xf32> to vector<2x16xf32>
      %74 = math.tanh %73 : vector<2x16xf32>
      %75 = vector.extract_strided_slice %60 {offsets = [0, 48], sizes = [2, 16], strides = [1, 1]} : vector<2x64xf32> to vector<2x16xf32>
      %76 = arith.negf %75 : vector<2x16xf32>
      %77 = math.exp %76 : vector<2x16xf32>
      %cst_35 = arith.constant 1.000000e+00 : f32
      %78 = vector.broadcast %cst_35 : f32 to vector<2x16xf32>
      %79 = arith.addf %78, %77 : vector<2x16xf32>
      %80 = arith.divf %78, %79 : vector<2x16xf32>
      %81 = arith.mulf %72, %arg15 : vector<2x16xf32>
      %82 = arith.mulf %66, %74 : vector<2x16xf32>
      %83 = arith.addf %81, %82 : vector<2x16xf32>
      %84 = math.tanh %83 : vector<2x16xf32>
      %85 = arith.mulf %80, %84 : vector<2x16xf32>
      %86 = vector.broadcast %16 : i32 to vector<2x1xi32>
      %87 = arith.cmpi slt, %86, %4 : vector<2x1xi32>
      %88 = vector.broadcast %17 : i32 to vector<2x1xi32>
      %89 = arith.cmpi slt, %88, %4 : vector<2x1xi32>
      %cst_36 = arith.constant 0.000000e+00 : f32
      %90 = vector.shape_cast %87 : vector<2x1xi1> to vector<2x1xi1>
      %91 = vector.broadcast %90 : vector<2x1xi1> to vector<2x16xi1>
      %92 = vector.broadcast %cst_36 : f32 to vector<2x16xf32>
      %93 = arith.select %91, %58, %92 : vector<2x16xi1>, vector<2x16xf32>
      %94 = vector.shape_cast %93 : vector<2x16xf32> to vector<1x2x16xf32>
      %95 = arith.index_cast %arg11 : i32 to index
      %c0_37 = arith.constant 0 : index
      %c0_38 = arith.constant 0 : index
      %96 = vector.load %arg5[%95, %c0_37, %c0_38] : memref<8x2x16xf32, #tpu.memory_space<vmem>>, vector<1x2x16xf32>
      tpu.vector_store %arg5[%95, %c0_37, %c0_38], %94 {strides = array<i32>} : memref<8x2x16xf32, #tpu.memory_space<vmem>>, vector<1x2x16xf32>,
      %cst_39 = arith.constant 0.000000e+00 : f32
      %97 = vector.shape_cast %89 : vector<2x1xi1> to vector<2x1xi1>
      %98 = vector.broadcast %97 : vector<2x1xi1> to vector<2x16xi1>
      %99 = vector.broadcast %cst_39 : f32 to vector<2x16xf32>
      %100 = arith.select %98, %85, %99 : vector<2x16xi1>, vector<2x16xf32>
      %101 = vector.shape_cast %100 : vector<2x16xf32> to vector<1x2x16xf32>
      %102 = arith.index_cast %18 : i32 to index
      %c0_40 = arith.constant 0 : index
      %c0_41 = arith.constant 0 : index
      %103 = vector.load %arg6[%102, %c0_40, %c0_41] : memref<8x2x16xf32, #tpu.memory_space<vmem>>, vector<1x2x16xf32>
      tpu.vector_store %arg6[%102, %c0_40, %c0_41], %101 {strides = array<i32>} : memref<8x2x16xf32, #tpu.memory_space<vmem>>, vector<1x2x16xf32>,
      %104 = vector.shape_cast %87 : vector<2x1xi1> to vector<2x1xi1>
      %105 = vector.broadcast %104 : vector<2x1xi1> to vector<2x16xi1>
      %106 = arith.select %105, %58, %arg12 : vector<2x16xi1>, vector<2x16xf32>
      %107 = vector.shape_cast %87 : vector<2x1xi1> to vector<2x1xi1>
      %108 = vector.broadcast %107 : vector<2x1xi1> to vector<2x16xi1>
      %109 = arith.select %108, %56, %arg13 : vector<2x16xi1>, vector<2x16xf32>
      %110 = vector.shape_cast %89 : vector<2x1xi1> to vector<2x1xi1>
      %111 = vector.broadcast %110 : vector<2x1xi1> to vector<2x16xi1>
      %112 = arith.select %111, %85, %arg14 : vector<2x16xi1>, vector<2x16xf32>
      %113 = vector.shape_cast %89 : vector<2x1xi1> to vector<2x1xi1>
      %114 = vector.broadcast %113 : vector<2x1xi1> to vector<2x16xi1>
      %115 = arith.select %114, %83, %arg15 : vector<2x16xi1>, vector<2x16xf32>
      scf.yield %106, %109, %112, %115 : vector<2x16xf32>, vector<2x16xf32>, vector<2x16xf32>, vector<2x16xf32>
    }
    %c8_i32_14 = arith.constant 8 : i32
    %c0_15 = arith.constant 0 : index
    %c0_16 = arith.constant 0 : index
    %12 = vector.load %arg7[%c0_15, %c0_16] : memref<2x16xf32, #tpu.memory_space<vmem>>, vector<2x16xf32>
    tpu.vector_store %arg7[%c0_15, %c0_16], %11#0 {strides = array<i32>} : memref<2x16xf32, #tpu.memory_space<vmem>>, vector<2x16xf32>,
    %c0_17 = arith.constant 0 : index
    %c0_18 = arith.constant 0 : index
    %13 = vector.load %arg8[%c0_17, %c0_18] : memref<2x16xf32, #tpu.memory_space<vmem>>, vector<2x16xf32>
    tpu.vector_store %arg8[%c0_17, %c0_18], %11#1 {strides = array<i32>} : memref<2x16xf32, #tpu.memory_space<vmem>>, vector<2x16xf32>,
    %c0_19 = arith.constant 0 : index
    %c0_20 = arith.constant 0 : index
    %14 = vector.load %arg9[%c0_19, %c0_20] : memref<2x16xf32, #tpu.memory_space<vmem>>, vector<2x16xf32>
    tpu.vector_store %arg9[%c0_19, %c0_20], %11#2 {strides = array<i32>} : memref<2x16xf32, #tpu.memory_space<vmem>>, vector<2x16xf32>,
    %c0_21 = arith.constant 0 : index
    %c0_22 = arith.constant 0 : index
    %15 = vector.load %arg10[%c0_21, %c0_22] : memref<2x16xf32, #tpu.memory_space<vmem>>, vector<2x16xf32>
    tpu.vector_store %arg10[%c0_21, %c0_22], %11#3 {strides = array<i32>} : memref<2x16xf32, #tpu.memory_space<vmem>>, vector<2x16xf32>,
    return
  }
  func.func @transform_0(%arg0: i32) -> (i32, i32, i32, i32) {
    %c0_i32 = arith.constant 0 : i32
    %c0_i32_0 = arith.constant 0 : i32
    %c0_i32_1 = arith.constant 0 : i32
    %c0_i32_2 = arith.constant 0 : i32
    return %c0_i32, %arg0, %c0_i32_0, %c0_i32_1 : i32, i32, i32, i32
  }
  func.func @transform_1(%arg0: i32) -> (i32, i32, i32, i32) {
    %c0_i32 = arith.constant 0 : i32
    %0 = arith.subi %c0_i32, %arg0 : i32
    %c1_i32 = arith.constant 1 : i32
    %c0_i32_0 = arith.constant 0 : i32
    %c0_i32_1 = arith.constant 0 : i32
    %c0_i32_2 = arith.constant 0 : i32
    return %c1_i32, %0, %c0_i32_0, %c0_i32_1 : i32, i32, i32, i32
  }
  func.func @transform_2(%arg0: i32) -> (i32, i32) {
    %c0_i32 = arith.constant 0 : i32
    %c0_i32_0 = arith.constant 0 : i32
    %c0_i32_1 = arith.constant 0 : i32
    return %c0_i32, %c0_i32_0 : i32, i32
  }
  func.func @transform_3(%arg0: i32) -> (i32, i32) {
    %c0_i32 = arith.constant 0 : i32
    %c0_i32_0 = arith.constant 0 : i32
    %c0_i32_1 = arith.constant 0 : i32
    return %c0_i32, %c0_i32_0 : i32, i32
  }
  func.func @transform_4(%arg0: i32) -> (i32, i32, i32) {
    %c0_i32 = arith.constant 0 : i32
    %c0_i32_0 = arith.constant 0 : i32
    %c0_i32_1 = arith.constant 0 : i32
    return %arg0, %c0_i32, %c0_i32_0 : i32, i32, i32
  }
  func.func @transform_5(%arg0: i32) -> (i32, i32, i32) {
    %c0_i32 = arith.constant 0 : i32
    %0 = arith.subi %c0_i32, %arg0 : i32
    %c0_i32_0 = arith.constant 0 : i32
    %c0_i32_1 = arith.constant 0 : i32
    %c0_i32_2 = arith.constant 0 : i32
    return %0, %c0_i32_0, %c0_i32_1 : i32, i32, i32
  }
}

</mosaic_0001>

<llo_original>
// kernel: text_encoder_forward.3
$region0: #{text_encoder_forward.3}
  #allocation0 [shape = 'u32[]', space=smem, size = 0x4, offset = 0x4, fixed_abs, tag = 'smem constant byte address 0x4 - core index']
  #allocation1 [shape = 'u32[144,128]{1,0:T(1,128)}', space=vmem, size = 0x12000, scoped, tag = 'internal scratch']
  #allocation2 [shape = 'f32[2,16]{1,0:T(2,128)}', space=vmem, size = 0x400, scoped, tag = 'scratch operand']
  #allocation3 [shape = 'f32[2,16]{1,0:T(2,128)}', space=vmem, size = 0x400, scoped, tag = 'scratch operand']
  #allocation4 [shape = 'f32[2,16]{1,0:T(2,128)}', space=vmem, size = 0x400, scoped, tag = 'scratch operand']
  #allocation5 [shape = 'f32[2,16]{1,0:T(2,128)}', space=vmem, size = 0x400, scoped, tag = 'scratch operand']
  %s0 = inlined_call_operand.vmem [shape: bf16[2,8,2,64], index: 0, kind: input, shape index: {}, may-alias: {0,1}]
  %s1 = inlined_call_operand.vmem [shape: bf16[2,8,2,64], index: 1, kind: input, shape index: {}, may-alias: {0,1}]
  %s2 = inlined_call_operand.vmem [shape: bf16[32,128], index: 2, kind: input, shape index: {}]
  %s3 = inlined_call_operand.vmem [shape: s32[2,1], index: 3, kind: input, shape index: {}]
  %s4 = inlined_call_operand.vmem [shape: f32[8,2,16], index: 4, kind: output, shape index: {0}]
  %s5 = inlined_call_operand.vmem [shape: f32[8,2,16], index: 5, kind: output, shape index: {1}]
  %6 = xla_tuple %s4, %s5
  %s7 = sld [smem:[#allocation0]]
  $region45: #{text_encoder_forward.3} parent=0
    _
  %s9 = ssub.s32 1, %s7
  %s10 = scalar_select 0, %s9, %s7
  // Predicated region
  $region2: #{text_encoder_forward.3} parent=0 // pred_check
    _
  $region3: #{text_encoder_forward.3} parent=0 // pred_check_branch
    %12 = sbr.rel (0) target = $region5
  $region4: #{text_encoder_forward.3} parent=0 // pred_region
    _
  $region5: #{text_encoder_forward.3} parent=0 // pred_fallthru
    _
  // Predicated region
  $region6: #{text_encoder_forward.3} parent=0 // pred_check
    _
  $region7: #{text_encoder_forward.3} parent=0 // pred_check_branch
    %14 = sbr.rel (0) target = $region9
  $region8: #{text_encoder_forward.3} parent=0 // pred_region
    %s15 = ssub.s32 0, 0
    %s16 = smul.u32 8, %s15
    %p17 = scmp.lt.s32.totalorder %s16, 7
    %s18 = scalar_select %p17, %s16, 7
    %s19 = sadd.s32 %s18, 8
    %s20 = scalar_lea.vmem %s1, %s19
    %s21 = ssub.s32 0, 0
    %s22 = smul.u32 8, %s21
  $region9: #{text_encoder_forward.3} parent=0 // pred_fallthru
    _
  // Predicated region
  $region10: #{text_encoder_forward.3} parent=0 // pred_check
    _
  $region11: #{text_encoder_forward.3} parent=0 // pred_check_branch
    %24 = sbr.rel (0) target = $region13
  $region12: #{text_encoder_forward.3} parent=0 // pred_region
    _
  $region13: #{text_encoder_forward.3} parent=0 // pred_fallthru
    _
  // Predicated region
  $region14: #{text_encoder_forward.3} parent=0 // pred_check
    _
  $region15: #{text_encoder_forward.3} parent=0 // pred_check_branch
    %26 = sbr.rel (0) target = $region17
  $region16: #{text_encoder_forward.3} parent=0 // pred_region
    _
  $region17: #{text_encoder_forward.3} parent=0 // pred_fallthru
    _
  %s27 = ssub.s32 0, 0
  %s28 = smul.u32 8, %s27
  %p29 = scmp.lt.s32.totalorder %s28, 7
  %s30 = scalar_select %p29, %s28, 7
  %s31 = sadd.s32 %s30, 8
  %s32 = scalar_lea.vmem %s1, %s31
  %s33 = ssub.s32 0, 0
  %s34 = smul.u32 8, %s33
  %p35 = scmp.lt.s32.totalorder %s34, 7
  %s36 = scalar_select %p35, %s34, 7
  %s37 = smul.addr %s36, 2
  %s38 = scalar_lea.vmem %s5, %s37
  %s39 = ssub.s32 0, 0
  %s40 = smul.u32 8, %s39
  %p41 = scmp.lt.s32.totalorder %s40, 7
  %s42 = scalar_select %p41, %s40, 7
  %s43 = sadd.s32 %s42, 8
  %s44 = scalar_lea.vmem %s1, %s43
  %s45 = ssub.s32 0, 0
  %s46 = smul.u32 8, %s45
  %s47 = ssub.s32 0, 0
  %s48 = smul.u32 8, %s47
  %p49 = scmp.lt.s32.totalorder %s48, 7
  %s50 = scalar_select %p49, %s48, 7
  %s51 = smul.addr %s50, 2
  %s52 = scalar_lea.vmem %s5, %s51
  %s53 = ssub.s32 0, 0
  %s54 = smul.u32 8, %s53
  %p56 = scmp.eq.s32.totalorder 0, 0
  // Predicated region
  $region18: #{text_encoder_forward.3} parent=0 // pred_check
    %p57 = pneg %p56
  $region19: #{text_encoder_forward.3} parent=0 // pred_check_branch
    %59 = sbr.rel (%p57) target = $region21
  $region20: #{text_encoder_forward.3} parent=0 // pred_region
    %vm60 = vcmask 123904
    %61 = vst.msk [vmem:[#allocation2] sm:$0x3] %vm60, 0.0
    %62 = vst.msk [vmem:[#allocation3] sm:$0x3] %vm60, 0.0
    %63 = vst.msk [vmem:[#allocation4] sm:$0x3] %vm60, 0.0
    %64 = vst.msk [vmem:[#allocation5] sm:$0x3] %vm60, 0.0
  $region21: #{text_encoder_forward.3} parent=0 // pred_fallthru
    _
  %v65 = vld [vmem:[%s2] sm:$0xf]
  %v66 = vld [vmem:[%s2 + $0x4] sm:$0xf]
  %v67 = vld [vmem:[%s2 + $0x8] sm:$0xf]
  %v68 = vld [vmem:[%s2 + $0xc] sm:$0xf]
  %v69 = vld [vmem:[%s3] sm:$0x3]
  %s70 = smul.u32 0, 8
  %v71 = vld [vmem:[#allocation2] sm:$0x3]
  %v72 = vld [vmem:[#allocation3] sm:$0x3]
  %v73 = vld [vmem:[#allocation4] sm:$0x3]
  %v74 = vld [vmem:[#allocation5] sm:$0x3]
  loop: start=0, step=1, limit=8
  $region22: #{text_encoder_forward.3} parent=0 // loop_pre_header
    _
  $region23: #{text_encoder_forward.3} parent=0 // loop_header
    %s76 = sphi 0, %s80
    %p77 = scmp.ge.s32.totalorder %s76, 8
    %v81 = vphi %v71, %v285
    %v82 = vphi %v72, %v297
    %v83 = vphi %v73, %v298
    %v84 = vphi %v74, %v310
  $region24: #{text_encoder_forward.3} parent=0 // loop_header_branch
    %79 = sbr.rel (%p77) target = $region28
  $region25: #{text_encoder_forward.3} parent=0 // loop_body
    %s85 = sadd.s32 %s70, %s76
    %s86 = ssub.s32 7, %s85
    %s87 = ssub.s32 7, %s76
    %s88 = scalar_lea.vmem %s0, %s76
    %v89 = vld [vmem:[%s88] sm:$0x1]
    %v90 = vunpack.c.l.bf16 %v89
    %s91 = scalar_lea.vmem %s44, %s87
    %v92 = vld [vmem:[%s91] sm:$0x1]
    %v93 = vunpack.c.l.bf16 %v92
    %95 = vrot.lane.b32.xlu0 %v83, 16
    %v96 = vpop.permute.xlu0 %95
    %vm98 = vcmask 130048
    %v99 = vsel %vm98, %v81, %v96
    %v100 = vpack.c.bf16 %v99, %v99
    %v105 = vunpack.c.l.b16 %v65
    %v106 = vunpack.c.l.b16 %v66
    %v107 = vunpack.c.l.b16 %v67
    %v108 = vunpack.c.l.b16 %v68
    %v109 = vpack.c.b16 %v106, %v105
    %v110 = vpack.c.b16 %v108, %v107
    %vm113 = vcmask 261120
    %v115 = vsel %vm113, %v100, 0
    %117 = vmatprep.subr.bf16.mxu0 0
    %118 = vmatpush1.bf16.msra.mxu0 0
    %119 = vmatprep.subr.bf16.mxu0 0
    %120 = vmatpush1.bf16.msra.mxu0 0
    %121 = vmatprep.subr.bf16.mxu0 0
    %122 = vmatpush1.bf16.msra.mxu0 0
    %123 = vmatprep.subr.bf16.mxu0 0
    %124 = vmatpush1.bf16.msra.mxu0 0
    %125 = vmatprep.subr.bf16.mxu0 0
    %126 = vmatpush1.bf16.msra.mxu0 0
    %127 = vmatprep.subr.bf16.mxu0 0
    %128 = vmatpush1.bf16.msra.mxu0 0
    %129 = vmatprep.subr.bf16.mxu0 0
    %130 = vmatpush1.bf16.msra.mxu0 %v110
    %131 = vmatprep.subr.bf16.mxu0 0
    %132 = vmatpush1.bf16.msra.mxu0 %v109
    %133 = vmatprep.subr.bf16.mxu0 0
    %134 = vmatpush2.bf16.msra.mxu0 0
    %135 = vmatprep.subr.bf16.mxu0 0
    %136 = vmatpush2.bf16.msra.mxu0 0
    %137 = vmatprep.subr.bf16.mxu0 0
    %138 = vmatpush2.bf16.msra.mxu0 0
    %139 = vmatprep.subr.bf16.mxu0 0
    %140 = vmatpush2.bf16.msra.mxu0 0
    %141 = vmatprep.subr.bf16.mxu0 0
    %142 = vmatpush2.bf16.msra.mxu0 0
    %143 = vmatprep.subr.bf16.mxu0 0
    %144 = vmatpush2.bf16.msra.mxu0 0
    %145 = vmatprep.subr.bf16.mxu0 0
    %146 = vmatpush2.bf16.msra.mxu0 0
    %147 = vmatprep.subr.bf16.mxu0 0
    %148 = vmatpush2.bf16.msra.mxu0 0
    %149 = vmatprep.mubr.bf16.mxu0 0
    %150 = vmatmul.mubr.bf16.gmra.mxu0 %v115
    %v151 = vpop.f32.mrf.mxu0
    %v152 = vadd.f32 0.0, %v151
    %v153 = vpop.f32.mrf.mxu0
    %v154 = vpop.f32.mrf.mxu0
    %v155 = vpop.f32.mrf.mxu0
    %156 = vdwg.mxu0
    %v157 = vadd.f32 %v90, %v152
    %v158 = vxor.u32 %v157, 2147483648
    %v159 = vmul.f32 %v158, 1.442695
    %v160 = vpow.pop %v159
    %v161 = vadd.f32 %v160, 1.0
    %v162 = vrcp.pop %v161
    %v163 = vmul.f32 1.0, %v162
    %v164 = vtanh.pop %v157
    %v167 = vunpack.c.l.s4 1983009808
    %v168 = vunpack.c.0.s8 %v167
    %v169 = vlaneseq
    %v170 = vshrl.u32 %v169, 7
    %v171 = vsub.s32 %v168, %v170
    %v172 = vrot.slane %v82, %v171
    %173 = vrot.lane.b32.xlu0 %v172, 16
    %v174 = vpop.permute.xlu0 %173
    %v176 = vmul.f32 %v163, %v174
    %178 = vrot.lane.b32.xlu0 %v164, 96
    %v179 = vpop.permute.xlu0 %178
    %v181 = vmul.f32 %v163, %v179
    %183 = vrot.lane.b32.xlu0 %v181, 16
    %v184 = vpop.permute.xlu0 %183
    %v186 = vadd.f32 %v176, %v184
    %v187 = vtanh.pop %v186
    %189 = vrot.lane.b32.xlu0 %v187, 32
    %v190 = vpop.permute.xlu0 %189
    %v192 = vmul.f32 %v163, %v190
    %v195 = vunpack.c.l.s4 1983009808
    %v196 = vunpack.c.0.s8 %v195
    %v197 = vlaneseq
    %v198 = vshrl.u32 %v197, 7
    %v199 = vsub.s32 %v196, %v198
    %v200 = vrot.slane %v152, %v199
    %201 = vrot.lane.b32.xlu0 %v200, 64
    %v202 = vpop.permute.xlu0 %201
    %v204 = vadd.f32 %v93, %v202
    %v205 = vxor.u32 %v204, 2147483648
    %v206 = vmul.f32 %v205, 1.442695
    %v207 = vpow.pop %v206
    %v208 = vadd.f32 %v207, 1.0
    %v209 = vrcp.pop %v208
    %v210 = vmul.f32 1.0, %v209
    %v211 = vtanh.pop %v204
    %v214 = vunpack.c.l.s4 1983009808
    %v215 = vunpack.c.0.s8 %v214
    %v216 = vlaneseq
    %v217 = vshrl.u32 %v216, 7
    %v218 = vsub.s32 %v215, %v217
    %v219 = vrot.slane %v84, %v218
    %220 = vrot.lane.b32.xlu0 %v219, 16
    %v221 = vpop.permute.xlu0 %220
    %v223 = vmul.f32 %v210, %v221
    %225 = vrot.lane.b32.xlu0 %v211, 96
    %v226 = vpop.permute.xlu0 %225
    %v228 = vmul.f32 %v210, %v226
    %230 = vrot.lane.b32.xlu0 %v228, 16
    %v231 = vpop.permute.xlu0 %230
    %v233 = vadd.f32 %v223, %v231
    %v234 = vtanh.pop %v233
    %236 = vrot.lane.b32.xlu0 %v234, 32
    %v237 = vpop.permute.xlu0 %236
    %v239 = vmul.f32 %v210, %v237
    %v240 = vstv %s85
    %vm241 = vcmp.lt.s32.totalorder %v240, %v69
    %v242 = vstv %s86
    %vm243 = vcmp.lt.s32.totalorder %v242, %v69
    %v244 = vsel %vm241, 1, 0
    %245 = vset.pattern.permute.xlu0 0
    %246 = vperm.xlu0 %245, %v244
    %v247 = vpop.permute.xlu0 %246
    %vm248 = vcmp.eq.s32.totalorder %v247, 1
    %v251 = vunpack.c.l.s4 1983009808
    %v252 = vunpack.c.0.s8 %v251
    %v253 = vlaneseq
    %v254 = vshrl.u32 %v253, 7
    %v255 = vsub.s32 %v252, %v254
    %v256 = vrot.slane %v192, %v255
    %257 = vrot.lane.b32.xlu0 %v256, 80
    %v258 = vpop.permute.xlu0 %257
    %v260 = vsel %vm248, %v258, 0.0
    %s261 = smul.u32 %s76, 2
    %s262 = scalar_lea.vmem %s4, %s261
    %vm263 = vcmask 123904
    %264 = vst.msk [vmem:[%s262] sm:$0x3] %vm263, %v260
    %v265 = vsel %vm243, 1, 0
    %266 = vset.pattern.permute.xlu0 0
    %267 = vperm.xlu0 %266, %v265
    %v268 = vpop.permute.xlu0 %267
    %vm269 = vcmp.eq.s32.totalorder %v268, 1
    %v272 = vunpack.c.l.s4 1983009808
    %v273 = vunpack.c.0.s8 %v272
    %v274 = vlaneseq
    %v275 = vshrl.u32 %v274, 7
    %v276 = vsub.s32 %v273, %v275
    %v277 = vrot.slane %v239, %v276
    %278 = vrot.lane.b32.xlu0 %v277, 80
    %v279 = vpop.permute.xlu0 %278
    %v281 = vsel %vm269, %v279, 0.0
    %s282 = smul.u32 %s87, 2
    %s283 = scalar_lea.vmem %s52, %s282
    %284 = vst.msk [vmem:[%s283] sm:$0x3] %vm263, %v281
    %v285 = vsel %vm248, %v258, %v81
    %v288 = vunpack.c.l.s4 1983009808
    %v289 = vunpack.c.0.s8 %v288
    %v290 = vlaneseq
    %v291 = vshrl.u32 %v290, 7
    %v292 = vsub.s32 %v289, %v291
    %v293 = vrot.slane %v186, %v292
    %294 = vrot.lane.b32.xlu0 %v293, 112
    %v295 = vpop.permute.xlu0 %294
    %v297 = vsel %vm248, %v295, %v82
    %v298 = vsel %vm269, %v279, %v83
    %v301 = vunpack.c.l.s4 1983009808
    %v302 = vunpack.c.0.s8 %v301
    %v303 = vlaneseq
    %v304 = vshrl.u32 %v303, 7
    %v305 = vsub.s32 %v302, %v304
    %v306 = vrot.slane %v233, %v305
    %307 = vrot.lane.b32.xlu0 %v306, 112
    %v308 = vpop.permute.xlu0 %307
    %v310 = vsel %vm269, %v308, %v84
  $region26: #{text_encoder_forward.3} parent=0 // loop_footer
    %s80 = sadd.s32 1, %s76
  $region27: #{text_encoder_forward.3} parent=0 // loop_footer_branch
    %75 = sbr.rel target = $region23
  $region28: #{text_encoder_forward.3} parent=0 // loop_exit
    _
  %vm311 = vcmask 123904
  %312 = vst.msk [vmem:[#allocation2] sm:$0x3] %vm311, %v81
  %313 = vst.msk [vmem:[#allocation3] sm:$0x3] %vm311, %v82
  %314 = vst.msk [vmem:[#allocation4] sm:$0x3] %vm311, %v83
  %315 = vst.msk [vmem:[#allocation5] sm:$0x3] %vm311, %v84
  %s316 = ssub.s32 0, 0
  %s317 = smul.u32 8, %s316
  %p318 = scmp.lt.s32.totalorder %s317, 7
  %s319 = scalar_select %p318, %s317, 7
  %s320 = smul.addr %s319, 2
  %s321 = scalar_lea.vmem %s5, %s320
  // Predicated region
  $region29: #{text_encoder_forward.3} parent=0 // pred_check
    _
  $region30: #{text_encoder_forward.3} parent=0 // pred_check_branch
    %323 = sbr.rel (0) target = $region32
  $region31: #{text_encoder_forward.3} parent=0 // pred_region
    _
  $region32: #{text_encoder_forward.3} parent=0 // pred_fallthru
    _
  // Predicated region
  $region33: #{text_encoder_forward.3} parent=0 // pred_check
    _
  $region34: #{text_encoder_forward.3} parent=0 // pred_check_branch
    %325 = sbr.rel (0) target = $region36
  $region35: #{text_encoder_forward.3} parent=0 // pred_region
    %s326 = ssub.s32 0, 0
    %s327 = smul.u32 8, %s326
  $region36: #{text_encoder_forward.3} parent=0 // pred_fallthru
    _
  // Predicated region
  $region37: #{text_encoder_forward.3} parent=0 // pred_check
    _
  $region38: #{text_encoder_forward.3} parent=0 // pred_check_branch
    %329 = sbr.rel (0) target = $region40
  $region39: #{text_encoder_forward.3} parent=0 // pred_region
    _
  $region40: #{text_encoder_forward.3} parent=0 // pred_fallthru
    _
  // Predicated region
  $region41: #{text_encoder_forward.3} parent=0 // pred_check
    _
  $region42: #{text_encoder_forward.3} parent=0 // pred_check_branch
    %331 = sbr.rel (0) target = $region44
  $region43: #{text_encoder_forward.3} parent=0 // pred_region
    %s332 = ssub.s32 0, 0
    %s333 = smul.u32 8, %s332
    %p334 = scmp.lt.s32.totalorder %s333, 7
    %s335 = scalar_select %p334, %s333, 7
    %s336 = smul.addr %s335, 2
    %s337 = scalar_lea.vmem %s5, %s336
  $region44: #{text_encoder_forward.3} parent=0 // pred_fallthru
    _

// kernel: text_encoder_forward.2
$region0: #{text_encoder_forward.2}
  #allocation0 [shape = 'u32[]', space=smem, size = 0x4, offset = 0x4, fixed_abs, tag = 'smem constant byte address 0x4 - core index']
  #allocation1 [shape = 'u32[144,128]{1,0:T(1,128)}', space=vmem, size = 0x12000, scoped, tag = 'internal scratch']
  #allocation2 [shape = 'bf16[2,12,32]{2,1,0:T(8,128)(2,1)}', space=vmem, size = 0x2000, scoped, tag = 'scratch operand']
  %s0 = inlined_call_operand.vmem [shape: s32[2,1], index: 0, kind: input, shape index: {}]
  %s1 = inlined_call_operand.vmem [shape: s32[2,8,1], index: 1, kind: input, shape index: {}]
  %s2 = inlined_call_operand.vmem [shape: bf16[40,32], index: 2, kind: input, shape index: {}]
  %s3 = inlined_call_operand.vmem [shape: bf16[3,160,32], index: 3, kind: input, shape index: {}]
  %s4 = inlined_call_operand.vmem [shape: f32[3,1,32], index: 4, kind: input, shape index: {}]
  %s5 = inlined_call_operand.vmem [shape: f32[3,1,32], index: 5, kind: input, shape index: {}]
  %s6 = inlined_call_operand.vmem [shape: f32[3,1,32], index: 6, kind: input, shape index: {}]
  %s7 = inlined_call_operand.vmem [shape: bf16[32,128], index: 7, kind: input, shape index: {}]
  %s8 = inlined_call_operand.vmem [shape: f32[1,128], index: 8, kind: input, shape index: {}]
  %s9 = inlined_call_operand.vmem [shape: bf16[2,8,2,64], index: 9, kind: output, shape index: {}]
  %s10 = sld [smem:[#allocation0]]
  $region46: #{text_encoder_forward.2} parent=0
    _
  %s12 = ssub.s32 1, %s10
  %s13 = scalar_select 0, %s12, %s10
  // Predicated region
  $region2: #{text_encoder_forward.2} parent=0 // pred_check
    _
  $region3: #{text_encoder_forward.2} parent=0 // pred_check_branch
    %15 = sbr.rel (0) target = $region5
  $region4: #{text_encoder_forward.2} parent=0 // pred_region
    _
  $region5: #{text_encoder_forward.2} parent=0 // pred_fallthru
    _
  // Predicated region
  $region6: #{text_encoder_forward.2} parent=0 // pred_check
    _
  $region7: #{text_encoder_forward.2} parent=0 // pred_check_branch
    %17 = sbr.rel (0) target = $region9
  $region8: #{text_encoder_forward.2} parent=0 // pred_region
    _
  $region9: #{text_encoder_forward.2} parent=0 // pred_fallthru
    _
  // Predicated region
  $region10: #{text_encoder_forward.2} parent=0 // pred_check
    _
  $region11: #{text_encoder_forward.2} parent=0 // pred_check_branch
    %19 = sbr.rel (0) target = $region13
  $region12: #{text_encoder_forward.2} parent=0 // pred_region
    _
  $region13: #{text_encoder_forward.2} parent=0 // pred_fallthru
    _
  // Predicated region
  $region14: #{text_encoder_forward.2} parent=0 // pred_check
    _
  $region15: #{text_encoder_forward.2} parent=0 // pred_check_branch
    %21 = sbr.rel (0) target = $region17
  $region16: #{text_encoder_forward.2} parent=0 // pred_region
    _
  $region17: #{text_encoder_forward.2} parent=0 // pred_fallthru
    _
  // Predicated region
  $region18: #{text_encoder_forward.2} parent=0 // pred_check
    _
  $region19: #{text_encoder_forward.2} parent=0 // pred_check_branch
    %23 = sbr.rel (0) target = $region21
  $region20: #{text_encoder_forward.2} parent=0 // pred_region
    _
  $region21: #{text_encoder_forward.2} parent=0 // pred_fallthru
    _
  // Predicated region
  $region22: #{text_encoder_forward.2} parent=0 // pred_check
    _
  $region23: #{text_encoder_forward.2} parent=0 // pred_check_branch
    %25 = sbr.rel (0) target = $region25
  $region24: #{text_encoder_forward.2} parent=0 // pred_region
    _
  $region25: #{text_encoder_forward.2} parent=0 // pred_fallthru
    _
  // Predicated region
  $region26: #{text_encoder_forward.2} parent=0 // pred_check
    _
  $region27: #{text_encoder_forward.2} parent=0 // pred_check_branch
    %27 = sbr.rel (0) target = $region29
  $region28: #{text_encoder_forward.2} parent=0 // pred_region
    _
  $region29: #{text_encoder_forward.2} parent=0 // pred_fallthru
    _
  // Predicated region
  $region30: #{text_encoder_forward.2} parent=0 // pred_check
    _
  $region31: #{text_encoder_forward.2} parent=0 // pred_check_branch
    %29 = sbr.rel (0) target = $region33
  $region32: #{text_encoder_forward.2} parent=0 // pred_region
    _
  $region33: #{text_encoder_forward.2} parent=0 // pred_fallthru
    _
  // Predicated region
  $region34: #{text_encoder_forward.2} parent=0 // pred_check
    _
  $region35: #{text_encoder_forward.2} parent=0 // pred_check_branch
    %31 = sbr.rel (0) target = $region37
  $region36: #{text_encoder_forward.2} parent=0 // pred_region
    _
  $region37: #{text_encoder_forward.2} parent=0 // pred_fallthru
    _
  %v33 = vld [vmem:[%s0] sm:$0x3]
  %v35 = vunpack.c.l.s4 1966171168
  %v36 = vunpack.c.0.s8 %v35
  %v37 = vlaneseq
  %v38 = vshrl.u32 %v37, 7
  %v39 = vsub.s32 %v36, %v38
  %v40 = vrot.slane %v33, %v39
  %v41 = vcombine.high %v40, %v40
  %v43 = vunpack.c.l.s4 1966171168
  %v44 = vunpack.c.0.s8 %v43
  %v45 = vlaneseq
  %v46 = vshrl.u32 %v45, 7
  %v47 = vsub.s32 %v44, %v46
  %v48 = vrot.slane %v40, %v47
  %v50 = vunpack.c.l.s4 1966171168
  %v51 = vunpack.c.0.s8 %v50
  %v52 = vlaneseq
  %v53 = vshrl.u32 %v52, 7
  %v54 = vsub.s32 %v51, %v53
  %v55 = vrot.slane %v41, %v54
  %v56 = vlaneseq
  %v57 = vshrl.u32 %v56, 7
  %v58 = vlaneseq
  %v59 = vshrl.u32 %v58, 7
  %v60 = vsub.s32 0, %v59
  %v61 = vrot.slane %v48, %v60
  %v62 = vlaneseq
  %v63 = vshrl.u32 %v62, 7
  %v64 = vsub.s32 0, %v63
  %v65 = vrot.slane %v55, %v64
  %vm66 = vcmp.lt.s32.totalorder %v57, %v61
  %vm67 = vcmp.lt.s32.totalorder %v57, %v65
  %v68 = vld [vmem:[%s1] sm:$0xff]
  %v69 = vld [vmem:[%s1 + $0x8] sm:$0xff]
  %v70 = vlaneseq
  %v71 = vand.u32 %v70, 127
  %72 = vset.pattern.permute.xlu0 0
  %73 = vperm.xlu0 %72, %v68
  %v74 = vpop.permute.xlu0 %73
  %75 = vset.pattern.permute.xlu0 0
  %76 = vperm.xlu0 %75, %v69
  %v77 = vpop.permute.xlu0 %76
  %vm78 = vcmp.eq.s32.totalorder %v71, %v74
  %vm79 = vcmp.eq.s32.totalorder %v71, %v77
  %v80 = vsel %vm78, 1, 0
  %v81 = vsel %vm79, 1, 0
  %v82 = vcvt.s32.f32 %v80
  %v83 = vcvt.s32.f32 %v81
  %v84 = vpack.c.bf16 %v83, %v82
  %v85 = vld [vmem:[%s2] sm:$0xf]
  %v86 = vld [vmem:[%s2 + $0x4] sm:$0xf]
  %v87 = vld [vmem:[%s2 + $0x8] sm:$0xf]
  %v88 = vld [vmem:[%s2 + $0xc] sm:$0xf]
  %v89 = vld [vmem:[%s2 + $0x10] sm:$0xf]
  %v95 = vunpack.c.l.b16 %v85
  %v96 = vunpack.c.l.b16 %v86
  %v97 = vunpack.c.l.b16 %v87
  %v98 = vunpack.c.l.b16 %v88
  %v99 = vunpack.c.l.b16 %v89
  %v100 = vpack.c.b16 %v96, %v95
  %v101 = vpack.c.b16 %v98, %v97
  %v102 = vpack.c.b16 %v99, %v99
  %vm105 = vcmask 326656
  %v107 = vsel %vm105, %v84, 0
  %vm109 = vcmask 1043456
  %v111 = vsel %vm109, %v102, 0
  %113 = vmatprep.subr.bf16.mxu0 0
  %114 = vmatpush1.bf16.msra.mxu0 0
  %115 = vmatprep.subr.bf16.mxu0 0
  %116 = vmatpush1.bf16.msra.mxu0 0
  %117 = vmatprep.subr.bf16.mxu0 0
  %118 = vmatpush1.bf16.msra.mxu0 0
  %119 = vmatprep.subr.bf16.mxu0 0
  %120 = vmatpush1.bf16.msra.mxu0 0
  %121 = vmatprep.subr.bf16.mxu0 0
  %122 = vmatpush1.bf16.msra.mxu0 0
  %123 = vmatprep.subr.bf16.mxu0 0
  %124 = vmatpush1.bf16.msra.mxu0 %v111
  %125 = vmatprep.subr.bf16.mxu0 0
  %126 = vmatpush1.bf16.msra.mxu0 %v101
  %127 = vmatprep.subr.bf16.mxu0 0
  %128 = vmatpush1.bf16.msra.mxu0 %v100
  %129 = vmatprep.subr.bf16.mxu0 0
  %130 = vmatpush2.bf16.msra.mxu0 0
  %131 = vmatprep.subr.bf16.mxu0 0
  %132 = vmatpush2.bf16.msra.mxu0 0
  %133 = vmatprep.subr.bf16.mxu0 0
  %134 = vmatpush2.bf16.msra.mxu0 0
  %135 = vmatprep.subr.bf16.mxu0 0
  %136 = vmatpush2.bf16.msra.mxu0 0
  %137 = vmatprep.subr.bf16.mxu0 0
  %138 = vmatpush2.bf16.msra.mxu0 0
  %139 = vmatprep.subr.bf16.mxu0 0
  %140 = vmatpush2.bf16.msra.mxu0 0
  %141 = vmatprep.subr.bf16.mxu0 0
  %142 = vmatpush2.bf16.msra.mxu0 0
  %143 = vmatprep.subr.bf16.mxu0 0
  %144 = vmatpush2.bf16.msra.mxu0 0
  %145 = vmatprep.mubr.bf16.mxu0 0
  %146 = vmatmul.mubr.bf16.gmra.mxu0 %v107
  %v147 = vpop.f32.mrf.mxu0
  %v148 = vadd.f32 0.0, %v147
  %v149 = vpop.f32.mrf.mxu0
  %v150 = vpop.f32.mrf.mxu0
  %v151 = vadd.f32 0.0, %v150
  %v152 = vpop.f32.mrf.mxu0
  %153 = vdwg.mxu0
  %v154 = vsel %vm66, 1, 0
  %v155 = vsel %vm67, 1, 0
  %156 = vset.pattern.permute.xlu0 0
  %157 = vperm.xlu0 %156, %v154
  %v158 = vpop.permute.xlu0 %157
  %159 = vset.pattern.permute.xlu0 0
  %160 = vperm.xlu0 %159, %v155
  %v161 = vpop.permute.xlu0 %160
  %vm162 = vcmp.eq.s32.totalorder %v158, 1
  %vm163 = vcmp.eq.s32.totalorder %v161, 1
  %v164 = vsel %vm162, %v148, 0.0
  %v165 = vsel %vm163, %v151, 0.0
  %vm166 = vcmask 253952
  %167 = vst.msk [vmem:[#allocation2] sm:$0x1] %vm166, 0
  %168 = vst.msk [vmem:[#allocation2 + $0x8] sm:$0x1] %vm166, 0
  %vm169 = vcmask 254977
  %170 = vst.msk [vmem:[#allocation2 + $0x4] sm:$0x2] %vm169, 0
  %171 = vst.msk [vmem:[#allocation2 + $0xc] sm:$0x2] %vm169, 0
  %v172 = vpack.c.bf16 %v164, %v164
  %v173 = vpack.c.bf16 %v165, %v165
  %v176 = vunpack.c.l.b16 %v172
  %v177 = vunpack.c.l.b16 %v173
  %v178 = vpack.c.b16 %v176, %v176
  %v179 = vpack.c.b16 %v177, %v177
  %v180 = vrot.slane %v178, 7
  %v181 = vrot.slane %v180, 4
  %v182 = vrot.slane %v179, 7
  %v183 = vrot.slane %v182, 4
  %vm188 = vcmask 257025
  %189 = vst.msk [vmem:[#allocation2] sm:$0xe] %vm188, %v180
  %190 = vst.msk [vmem:[#allocation2 + $0x4] sm:$0x1] %vm166, %v181
  %191 = vst.msk [vmem:[#allocation2 + $0x8] sm:$0xe] %vm188, %v182
  %192 = vst.msk [vmem:[#allocation2 + $0xc] sm:$0x1] %vm166, %v183
  %v193 = vld [vmem:[#allocation2] sm:$0xf]
  %v194 = vld [vmem:[#allocation2 + $0x4] sm:$0x3]
  %v195 = vld [vmem:[#allocation2 + $0x8] sm:$0xf]
  %v196 = vld [vmem:[#allocation2 + $0xc] sm:$0x3]
  %vm197 = vsmask.f32 3328
  %vm198 = vsmask.f32 7440
  %vm199 = vmor %vm197, %vm198
  %v201 = vshrl.u32 %v193, 16
  %v203 = vrot.slane %v201, 4
  %v204 = vshll.u32 %v193, 16
  %v206 = vrot.slane %v204, 5
  %v207 = vor.u32 %v203, %v206
  %v208 = vrot.slane %v207, 4
  %v210 = vshll.u32 %v194, 16
  %v212 = vrot.slane %v210, 5
  %v213 = vsel %vm199, %v208, %v212
  %v215 = vshrl.u32 %v195, 16
  %v217 = vrot.slane %v215, 4
  %v218 = vshll.u32 %v195, 16
  %v220 = vrot.slane %v218, 5
  %v221 = vor.u32 %v217, %v220
  %v222 = vrot.slane %v221, 4
  %v224 = vshll.u32 %v196, 16
  %v226 = vrot.slane %v224, 5
  %v227 = vsel %vm199, %v222, %v226
  %vm232 = vcmask 1042432
  %vm233 = vcmask 1046532
  %vm234 = vmor %vm232, %vm233
  %v235 = vrot.slane %v193, 5
  %v236 = vrot.slane %v235, 4
  %v237 = vrot.slane %v194, 5
  %v238 = vsel %vm234, %v236, %v237
  %v239 = vrot.slane %v195, 5
  %v240 = vrot.slane %v239, 4
  %v241 = vrot.slane %v196, 5
  %v242 = vsel %vm234, %v240, %v241
  %vm243 = vsmask.f32 2304
  %vm244 = vsmask.f32 6416
  %vm245 = vmor %vm243, %vm244
  %v246 = vrot.slane %v201, 5
  %v247 = vrot.slane %v204, 6
  %v248 = vor.u32 %v246, %v247
  %v249 = vrot.slane %v248, 4
  %v250 = vshrl.u32 %v194, 16
  %v252 = vrot.slane %v250, 5
  %v253 = vrot.slane %v210, 6
  %v254 = vor.u32 %v252, %v253
  %v255 = vsel %vm245, %v249, %v254
  %v256 = vrot.slane %v215, 5
  %v257 = vrot.slane %v218, 6
  %v258 = vor.u32 %v256, %v257
  %v259 = vrot.slane %v258, 4
  %v260 = vshrl.u32 %v196, 16
  %v262 = vrot.slane %v260, 5
  %v263 = vrot.slane %v224, 6
  %v264 = vor.u32 %v262, %v263
  %v265 = vsel %vm245, %v259, %v264
  %vm266 = vcmask 1041408
  %vm267 = vcmask 1045508
  %vm268 = vmor %vm266, %vm267
  %v269 = vrot.slane %v193, 6
  %v270 = vrot.slane %v269, 4
  %v271 = vrot.slane %v194, 6
  %v272 = vsel %vm268, %v270, %v271
  %v273 = vrot.slane %v195, 6
  %v274 = vrot.slane %v273, 4
  %v275 = vrot.slane %v196, 6
  %v276 = vsel %vm268, %v274, %v275
  %v277 = vunpack.c.l.b16 %v193
  %v278 = vunpack.c.l.b16 %v195
  %v279 = vpack.c.b16 %v278, %v277
  %v280 = vunpack.c.l.b16 %v213
  %v281 = vunpack.c.l.b16 %v227
  %v282 = vpack.c.b16 %v281, %v280
  %283 = vrot.lane.b32.xlu0 %v282, 32
  %v284 = vpop.permute.xlu0 %283
  %v285 = vunpack.c.l.b16 %v238
  %v286 = vunpack.c.l.b16 %v242
  %v287 = vpack.c.b16 %v286, %v285
  %288 = vrot.lane.b32.xlu0 %v287, 64
  %v289 = vpop.permute.xlu0 %288
  %v290 = vunpack.c.l.b16 %v255
  %v291 = vunpack.c.l.b16 %v265
  %v292 = vpack.c.b16 %v291, %v290
  %293 = vrot.lane.b32.xlu0 %v292, 96
  %v294 = vpop.permute.xlu0 %293
  %v295 = vunpack.c.l.b16 %v272
  %v296 = vunpack.c.l.b16 %v276
  %v297 = vpack.c.b16 %v296, %v295
  %vm298 = vcmask 261120
  %v301 = vsel %vm298, %v279, %v284
  %vm302 = vcmask 523264
  %v304 = vsel %vm302, %v301, %v289
  %vm305 = vcmask 785408
  %v307 = vsel %vm305, %v304, %v294
  %v309 = vld [vmem:[%s3] sm:$0xf]
  %v310 = vld [vmem:[%s3 + $0x4] sm:$0xf]
  %v311 = vld [vmem:[%s3 + $0x8] sm:$0xf]
  %v312 = vld [vmem:[%s3 + $0xc] sm:$0xf]
  %v313 = vld [vmem:[%s3 + $0x10] sm:$0xf]
  %v314 = vld [vmem:[%s3 + $0x14] sm:$0xf]
  %v315 = vld [vmem:[%s3 + $0x18] sm:$0xf]
  %v316 = vld [vmem:[%s3 + $0x1c] sm:$0xf]
  %v317 = vld [vmem:[%s3 + $0x20] sm:$0xf]
  %v318 = vld [vmem:[%s3 + $0x24] sm:$0xf]
  %v319 = vld [vmem:[%s3 + $0x28] sm:$0xf]
  %v320 = vld [vmem:[%s3 + $0x2c] sm:$0xf]
  %v321 = vld [vmem:[%s3 + $0x30] sm:$0xf]
  %v322 = vld [vmem:[%s3 + $0x34] sm:$0xf]
  %v323 = vld [vmem:[%s3 + $0x38] sm:$0xf]
  %v324 = vld [vmem:[%s3 + $0x3c] sm:$0xf]
  %v325 = vld [vmem:[%s3 + $0x40] sm:$0xf]
  %v326 = vld [vmem:[%s3 + $0x44] sm:$0xf]
  %v327 = vld [vmem:[%s3 + $0x48] sm:$0xf]
  %v328 = vld [vmem:[%s3 + $0x4c] sm:$0xf]
  %v329 = vld [vmem:[%s4] sm:$0x1]
  %v331 = vlaneseq
  %v332 = vshrl.u32 %v331, 7
  %v333 = vsub.s32 0, %v332
  %v334 = vrot.slane %v329, %v333
  %v356 = vunpack.c.l.b16 %v309
  %v357 = vunpack.c.l.b16 %v310
  %v358 = vunpack.c.l.b16 %v311
  %v359 = vunpack.c.l.b16 %v312
  %v360 = vunpack.c.l.b16 %v313
  %v361 = vunpack.c.l.b16 %v314
  %v362 = vunpack.c.l.b16 %v315
  %v363 = vunpack.c.l.b16 %v316
  %v364 = vunpack.c.l.b16 %v317
  %v365 = vunpack.c.l.b16 %v318
  %v366 = vunpack.c.l.b16 %v319
  %v367 = vunpack.c.l.b16 %v320
  %v368 = vunpack.c.l.b16 %v321
  %v369 = vunpack.c.l.b16 %v322
  %v370 = vunpack.c.l.b16 %v323
  %v371 = vunpack.c.l.b16 %v324
  %v372 = vunpack.c.l.b16 %v325
  %v373 = vunpack.c.l.b16 %v326
  %v374 = vunpack.c.l.b16 %v327
  %v375 = vunpack.c.l.b16 %v328
  %v376 = vpack.c.b16 %v357, %v356
  %v377 = vpack.c.b16 %v359, %v358
  %v378 = vpack.c.b16 %v361, %v360
  %v379 = vpack.c.b16 %v363, %v362
  %v380 = vpack.c.b16 %v365, %v364
  %v381 = vpack.c.b16 %v367, %v366
  %v382 = vpack.c.b16 %v369, %v368
  %v383 = vpack.c.b16 %v371, %v370
  %v384 = vpack.c.b16 %v373, %v372
  %v385 = vpack.c.b16 %v375, %v374
  %v397 = vsel %vm298, %v297, 0
  %399 = vmatprep.subr.bf16.mxu0 0
  %400 = vmatpush1.bf16.msra.mxu0 %v383
  %401 = vmatprep.subr.bf16.mxu0 0
  %402 = vmatpush1.bf16.msra.mxu0 %v382
  %403 = vmatprep.subr.bf16.mxu0 0
  %404 = vmatpush1.bf16.msra.mxu0 %v381
  %405 = vmatprep.subr.bf16.mxu0 0
  %406 = vmatpush1.bf16.msra.mxu0 %v380
  %407 = vmatprep.subr.bf16.mxu0 0
  %408 = vmatpush1.bf16.msra.mxu0 %v379
  %409 = vmatprep.subr.bf16.mxu0 0
  %410 = vmatpush1.bf16.msra.mxu0 %v378
  %411 = vmatprep.subr.bf16.mxu0 0
  %412 = vmatpush1.bf16.msra.mxu0 %v377
  %413 = vmatprep.subr.bf16.mxu0 0
  %414 = vmatpush1.bf16.msra.mxu0 %v376
  %415 = vmatprep.subr.bf16.mxu0 0
  %416 = vmatpush2.bf16.msra.mxu0 0
  %417 = vmatprep.subr.bf16.mxu0 0
  %418 = vmatpush2.bf16.msra.mxu0 0
  %419 = vmatprep.subr.bf16.mxu0 0
  %420 = vmatpush2.bf16.msra.mxu0 0
  %421 = vmatprep.subr.bf16.mxu0 0
  %422 = vmatpush2.bf16.msra.mxu0 0
  %423 = vmatprep.subr.bf16.mxu0 0
  %424 = vmatpush2.bf16.msra.mxu0 0
  %425 = vmatprep.subr.bf16.mxu0 0
  %426 = vmatpush2.bf16.msra.mxu0 0
  %427 = vmatprep.subr.bf16.mxu0 0
  %428 = vmatpush2.bf16.msra.mxu0 %v385
  %429 = vmatprep.subr.bf16.mxu0 0
  %430 = vmatpush2.bf16.msra.mxu0 %v384
  %431 = vmatprep.mubr.bf16.mxu0 %v397
  %432 = vmatmul.mubr.bf16.gmra.mxu0 %v307
  %v433 = vpop.f32.mrf.mxu0
  %v434 = vadd.f32 %v334, %v433
  %v435 = vpop.f32.mrf.mxu0
  %v436 = vpop.f32.mrf.mxu0
  %v437 = vadd.f32 %v334, %v436
  %v438 = vpop.f32.mrf.mxu0
  %439 = vdwg.mxu0
  %v440 = vsel %vm298, %v434, 0.0
  %441 = vadd.xlane.f32.xlu0 %v440
  %v442 = vpop.xlane.xlu0 %441
  %v443 = vsel %vm298, %v437, 0.0
  %444 = vadd.xlane.f32.xlu0 %v443
  %v445 = vpop.xlane.xlu0 %444
  %v446 = vrcp.pop 32.0
  %v447 = vmul.f32 %v442, %v446
  %v448 = vmul.f32 %v445, %v446
  %v449 = vsub.f32 %v434, %v447
  %v450 = vsub.f32 %v437, %v448
  %v451 = vmul.f32 %v449, %v449
  %v452 = vmul.f32 %v450, %v450
  %v453 = vsel %vm298, %v451, 0.0
  %454 = vadd.xlane.f32.xlu0 %v453
  %v455 = vpop.xlane.xlu0 %454
  %v456 = vsel %vm298, %v452, 0.0
  %457 = vadd.xlane.f32.xlu0 %v456
  %v458 = vpop.xlane.xlu0 %457
  %v459 = vmul.f32 %v455, %v446
  %v460 = vmul.f32 %v458, %v446
  %v461 = vadd.f32 %v459, 1e-05
  %v462 = vadd.f32 %v460, 1e-05
  %v463 = vrsqrt.pop %v461
  %v464 = vrsqrt.pop %v462
  %v465 = vmul.f32 %v449, %v463
  %v466 = vmul.f32 %v450, %v464
  %v467 = vld [vmem:[%s5] sm:$0x1]
  %v469 = vlaneseq
  %v470 = vshrl.u32 %v469, 7
  %v471 = vsub.s32 0, %v470
  %v472 = vrot.slane %v467, %v471
  %v474 = vmul.f32 %v465, %v472
  %v475 = vmul.f32 %v466, %v472
  %v476 = vld [vmem:[%s6] sm:$0x1]
  %v478 = vlaneseq
  %v479 = vshrl.u32 %v478, 7
  %v480 = vsub.s32 0, %v479
  %v481 = vrot.slane %v476, %v480
  %v483 = vadd.f32 %v474, %v481
  %v484 = vadd.f32 %v475, %v481
  %vm485 = vcmp.ge.f32.partialorder %v483, 0.0
  %vm486 = vcmp.ge.f32.partialorder %v484, 0.0
  %v487 = vmul.f32 %v483, 0.2
  %v488 = vmul.f32 %v484, 0.2
  %v489 = vsel %vm485, %v483, %v487
  %v490 = vsel %vm486, %v484, %v488
  %v491 = vsel %vm162, %v489, 0.0
  %v492 = vsel %vm163, %v490, 0.0
  %v493 = vpack.c.bf16 %v491, %v491
  %v494 = vpack.c.bf16 %v492, %v492
  %v497 = vunpack.c.l.b16 %v493
  %v498 = vunpack.c.l.b16 %v494
  %v499 = vpack.c.b16 %v497, %v497
  %v500 = vpack.c.b16 %v498, %v498
  %v501 = vrot.slane %v499, 7
  %v502 = vrot.slane %v501, 4
  %v503 = vrot.slane %v500, 7
  %v504 = vrot.slane %v503, 4
  %509 = vst.msk [vmem:[#allocation2] sm:$0xe] %vm188, %v501
  %510 = vst.msk [vmem:[#allocation2 + $0x4] sm:$0x1] %vm166, %v502
  %511 = vst.msk [vmem:[#allocation2 + $0x8] sm:$0xe] %vm188, %v503
  %512 = vst.msk [vmem:[#allocation2 + $0xc] sm:$0x1] %vm166, %v504
  %v513 = vld [vmem:[#allocation2] sm:$0xf]
  %v514 = vld [vmem:[#allocation2 + $0x4] sm:$0x3]
  %v515 = vld [vmem:[#allocation2 + $0x8] sm:$0xf]
  %v516 = vld [vmem:[#allocation2 + $0xc] sm:$0x3]
  %v518 = vshrl.u32 %v513, 16
  %v520 = vrot.slane %v518, 4
  %v521 = vshll.u32 %v513, 16
  %v523 = vrot.slane %v521, 5
  %v524 = vor.u32 %v520, %v523
  %v525 = vrot.slane %v524, 4
  %v527 = vshll.u32 %v514, 16
  %v529 = vrot.slane %v527, 5
  %v530 = vsel %vm199, %v525, %v529
  %v532 = vshrl.u32 %v515, 16
  %v534 = vrot.slane %v532, 4
  %v535 = vshll.u32 %v515, 16
  %v537 = vrot.slane %v535, 5
  %v538 = vor.u32 %v534, %v537
  %v539 = vrot.slane %v538, 4
  %v541 = vshll.u32 %v516, 16
  %v543 = vrot.slane %v541, 5
  %v544 = vsel %vm199, %v539, %v543
  %v549 = vrot.slane %v513, 5
  %v550 = vrot.slane %v549, 4
  %v551 = vrot.slane %v514, 5
  %v552 = vsel %vm234, %v550, %v551
  %v553 = vrot.slane %v515, 5
  %v554 = vrot.slane %v553, 4
  %v555 = vrot.slane %v516, 5
  %v556 = vsel %vm234, %v554, %v555
  %v557 = vrot.slane %v518, 5
  %v558 = vrot.slane %v521, 6
  %v559 = vor.u32 %v557, %v558
  %v560 = vrot.slane %v559, 4
  %v561 = vshrl.u32 %v514, 16
  %v563 = vrot.slane %v561, 5
  %v564 = vrot.slane %v527, 6
  %v565 = vor.u32 %v563, %v564
  %v566 = vsel %vm245, %v560, %v565
  %v567 = vrot.slane %v532, 5
  %v568 = vrot.slane %v535, 6
  %v569 = vor.u32 %v567, %v568
  %v570 = vrot.slane %v569, 4
  %v571 = vshrl.u32 %v516, 16
  %v573 = vrot.slane %v571, 5
  %v574 = vrot.slane %v541, 6
  %v575 = vor.u32 %v573, %v574
  %v576 = vsel %vm245, %v570, %v575
  %v577 = vrot.slane %v513, 6
  %v578 = vrot.slane %v577, 4
  %v579 = vrot.slane %v514, 6
  %v580 = vsel %vm268, %v578, %v579
  %v581 = vrot.slane %v515, 6
  %v582 = vrot.slane %v581, 4
  %v583 = vrot.slane %v516, 6
  %v584 = vsel %vm268, %v582, %v583
  %v585 = vunpack.c.l.b16 %v513
  %v586 = vunpack.c.l.b16 %v515
  %v587 = vpack.c.b16 %v586, %v585
  %v588 = vunpack.c.l.b16 %v530
  %v589 = vunpack.c.l.b16 %v544
  %v590 = vpack.c.b16 %v589, %v588
  %591 = vrot.lane.b32.xlu0 %v590, 32
  %v592 = vpop.permute.xlu0 %591
  %v593 = vunpack.c.l.b16 %v552
  %v594 = vunpack.c.l.b16 %v556
  %v595 = vpack.c.b16 %v594, %v593
  %596 = vrot.lane.b32.xlu0 %v595, 64
  %v597 = vpop.permute.xlu0 %596
  %v598 = vunpack.c.l.b16 %v566
  %v599 = vunpack.c.l.b16 %v576
  %v600 = vpack.c.b16 %v599, %v598
  %601 = vrot.lane.b32.xlu0 %v600, 96
  %v602 = vpop.permute.xlu0 %601
  %v603 = vunpack.c.l.b16 %v580
  %v604 = vunpack.c.l.b16 %v584
  %v605 = vpack.c.b16 %v604, %v603
  %v608 = vsel %vm298, %v587, %v592
  %v610 = vsel %vm302, %v608, %v597
  %v612 = vsel %vm305, %v610, %v602
  %s614 = scalar_lea.vmem %s3, 80
  %v615 = vld [vmem:[%s614] sm:$0xf]
  %v616 = vld [vmem:[%s614 + $0x4] sm:$0xf]
  %v617 = vld [vmem:[%s614 + $0x8] sm:$0xf]
  %v618 = vld [vmem:[%s614 + $0xc] sm:$0xf]
  %v619 = vld [vmem:[%s614 + $0x10] sm:$0xf]
  %v620 = vld [vmem:[%s614 + $0x14] sm:$0xf]
  %v621 = vld [vmem:[%s614 + $0x18] sm:$0xf]
  %v622 = vld [vmem:[%s614 + $0x1c] sm:$0xf]
  %v623 = vld [vmem:[%s614 + $0x20] sm:$0xf]
  %v624 = vld [vmem:[%s614 + $0x24] sm:$0xf]
  %v625 = vld [vmem:[%s614 + $0x28] sm:$0xf]
  %v626 = vld [vmem:[%s614 + $0x2c] sm:$0xf]
  %v627 = vld [vmem:[%s614 + $0x30] sm:$0xf]
  %v628 = vld [vmem:[%s614 + $0x34] sm:$0xf]
  %v629 = vld [vmem:[%s614 + $0x38] sm:$0xf]
  %v630 = vld [vmem:[%s614 + $0x3c] sm:$0xf]
  %v631 = vld [vmem:[%s614 + $0x40] sm:$0xf]
  %v632 = vld [vmem:[%s614 + $0x44] sm:$0xf]
  %v633 = vld [vmem:[%s614 + $0x48] sm:$0xf]
  %v634 = vld [vmem:[%s614 + $0x4c] sm:$0xf]
  %s635 = scalar_lea.vmem %s4, 1
  %v636 = vld [vmem:[%s635] sm:$0x1]
  %v638 = vlaneseq
  %v639 = vshrl.u32 %v638, 7
  %v640 = vsub.s32 0, %v639
  %v641 = vrot.slane %v636, %v640
  %v663 = vunpack.c.l.b16 %v615
  %v664 = vunpack.c.l.b16 %v616
  %v665 = vunpack.c.l.b16 %v617
  %v666 = vunpack.c.l.b16 %v618
  %v667 = vunpack.c.l.b16 %v619
  %v668 = vunpack.c.l.b16 %v620
  %v669 = vunpack.c.l.b16 %v621
  %v670 = vunpack.c.l.b16 %v622
  %v671 = vunpack.c.l.b16 %v623
  %v672 = vunpack.c.l.b16 %v624
  %v673 = vunpack.c.l.b16 %v625
  %v674 = vunpack.c.l.b16 %v626
  %v675 = vunpack.c.l.b16 %v627
  %v676 = vunpack.c.l.b16 %v628
  %v677 = vunpack.c.l.b16 %v629
  %v678 = vunpack.c.l.b16 %v630
  %v679 = vunpack.c.l.b16 %v631
  %v680 = vunpack.c.l.b16 %v632
  %v681 = vunpack.c.l.b16 %v633
  %v682 = vunpack.c.l.b16 %v634
  %v683 = vpack.c.b16 %v664, %v663
  %v684 = vpack.c.b16 %v666, %v665
  %v685 = vpack.c.b16 %v668, %v667
  %v686 = vpack.c.b16 %v670, %v669
  %v687 = vpack.c.b16 %v672, %v671
  %v688 = vpack.c.b16 %v674, %v673
  %v689 = vpack.c.b16 %v676, %v675
  %v690 = vpack.c.b16 %v678, %v677
  %v691 = vpack.c.b16 %v680, %v679
  %v692 = vpack.c.b16 %v682, %v681
  %v704 = vsel %vm298, %v605, 0
  %706 = vmatprep.subr.bf16.mxu0 0
  %707 = vmatpush1.bf16.msra.mxu0 %v690
  %708 = vmatprep.subr.bf16.mxu0 0
  %709 = vmatpush1.bf16.msra.mxu0 %v689
  %710 = vmatprep.subr.bf16.mxu0 0
  %711 = vmatpush1.bf16.msra.mxu0 %v688
  %712 = vmatprep.subr.bf16.mxu0 0
  %713 = vmatpush1.bf16.msra.mxu0 %v687
  %714 = vmatprep.subr.bf16.mxu0 0
  %715 = vmatpush1.bf16.msra.mxu0 %v686
  %716 = vmatprep.subr.bf16.mxu0 0
  %717 = vmatpush1.bf16.msra.mxu0 %v685
  %718 = vmatprep.subr.bf16.mxu0 0
  %719 = vmatpush1.bf16.msra.mxu0 %v684
  %720 = vmatprep.subr.bf16.mxu0 0
  %721 = vmatpush1.bf16.msra.mxu0 %v683
  %722 = vmatprep.subr.bf16.mxu0 0
  %723 = vmatpush2.bf16.msra.mxu0 0
  %724 = vmatprep.subr.bf16.mxu0 0
  %725 = vmatpush2.bf16.msra.mxu0 0
  %726 = vmatprep.subr.bf16.mxu0 0
  %727 = vmatpush2.bf16.msra.mxu0 0
  %728 = vmatprep.subr.bf16.mxu0 0
  %729 = vmatpush2.bf16.msra.mxu0 0
  %730 = vmatprep.subr.bf16.mxu0 0
  %731 = vmatpush2.bf16.msra.mxu0 0
  %732 = vmatprep.subr.bf16.mxu0 0
  %733 = vmatpush2.bf16.msra.mxu0 0
  %734 = vmatprep.subr.bf16.mxu0 0
  %735 = vmatpush2.bf16.msra.mxu0 %v692
  %736 = vmatprep.subr.bf16.mxu0 0
  %737 = vmatpush2.bf16.msra.mxu0 %v691
  %738 = vmatprep.mubr.bf16.mxu0 %v704
  %739 = vmatmul.mubr.bf16.gmra.mxu0 %v612
  %v740 = vpop.f32.mrf.mxu0
  %v741 = vadd.f32 %v641, %v740
  %v742 = vpop.f32.mrf.mxu0
  %v743 = vpop.f32.mrf.mxu0
  %v744 = vadd.f32 %v641, %v743
  %v745 = vpop.f32.mrf.mxu0
  %746 = vdwg.mxu0
  %v747 = vsel %vm298, %v741, 0.0
  %748 = vadd.xlane.f32.xlu0 %v747
  %v749 = vpop.xlane.xlu0 %748
  %v750 = vsel %vm298, %v744, 0.0
  %751 = vadd.xlane.f32.xlu0 %v750
  %v752 = vpop.xlane.xlu0 %751
  %v753 = vmul.f32 %v749, %v446
  %v754 = vmul.f32 %v752, %v446
  %v755 = vsub.f32 %v741, %v753
  %v756 = vsub.f32 %v744, %v754
  %v757 = vmul.f32 %v755, %v755
  %v758 = vmul.f32 %v756, %v756
  %v759 = vsel %vm298, %v757, 0.0
  %760 = vadd.xlane.f32.xlu0 %v759
  %v761 = vpop.xlane.xlu0 %760
  %v762 = vsel %vm298, %v758, 0.0
  %763 = vadd.xlane.f32.xlu0 %v762
  %v764 = vpop.xlane.xlu0 %763
  %v765 = vmul.f32 %v761, %v446
  %v766 = vmul.f32 %v764, %v446
  %v767 = vadd.f32 %v765, 1e-05
  %v768 = vadd.f32 %v766, 1e-05
  %v769 = vrsqrt.pop %v767
  %v770 = vrsqrt.pop %v768
  %v771 = vmul.f32 %v755, %v769
  %v772 = vmul.f32 %v756, %v770
  %s773 = scalar_lea.vmem %s5, 1
  %v774 = vld [vmem:[%s773] sm:$0x1]
  %v776 = vlaneseq
  %v777 = vshrl.u32 %v776, 7
  %v778 = vsub.s32 0, %v777
  %v779 = vrot.slane %v774, %v778
  %v781 = vmul.f32 %v771, %v779
  %v782 = vmul.f32 %v772, %v779
  %s783 = scalar_lea.vmem %s6, 1
  %v784 = vld [vmem:[%s783] sm:$0x1]
  %v786 = vlaneseq
  %v787 = vshrl.u32 %v786, 7
  %v788 = vsub.s32 0, %v787
  %v789 = vrot.slane %v784, %v788
  %v791 = vadd.f32 %v781, %v789
  %v792 = vadd.f32 %v782, %v789
  %vm793 = vcmp.ge.f32.partialorder %v791, 0.0
  %vm794 = vcmp.ge.f32.partialorder %v792, 0.0
  %v795 = vmul.f32 %v791, 0.2
  %v796 = vmul.f32 %v792, 0.2
  %v797 = vsel %vm793, %v791, %v795
  %v798 = vsel %vm794, %v792, %v796
  %v799 = vsel %vm162, %v797, 0.0
  %v800 = vsel %vm163, %v798, 0.0
  %v801 = vpack.c.bf16 %v799, %v799
  %v802 = vpack.c.bf16 %v800, %v800
  %v805 = vunpack.c.l.b16 %v801
  %v806 = vunpack.c.l.b16 %v802
  %v807 = vpack.c.b16 %v805, %v805
  %v808 = vpack.c.b16 %v806, %v806
  %v809 = vrot.slane %v807, 7
  %v810 = vrot.slane %v809, 4
  %v811 = vrot.slane %v808, 7
  %v812 = vrot.slane %v811, 4
  %817 = vst.msk [vmem:[#allocation2] sm:$0xe] %vm188, %v809
  %818 = vst.msk [vmem:[#allocation2 + $0x4] sm:$0x1] %vm166, %v810
  %819 = vst.msk [vmem:[#allocation2 + $0x8] sm:$0xe] %vm188, %v811
  %820 = vst.msk [vmem:[#allocation2 + $0xc] sm:$0x1] %vm166, %v812
  %v821 = vld [vmem:[#allocation2] sm:$0xf]
  %v822 = vld [vmem:[#allocation2 + $0x4] sm:$0x3]
  %v823 = vld [vmem:[#allocation2 + $0x8] sm:$0xf]
  %v824 = vld [vmem:[#allocation2 + $0xc] sm:$0x3]
  %v826 = vshrl.u32 %v821, 16
  %v828 = vrot.slane %v826, 4
  %v829 = vshll.u32 %v821, 16
  %v831 = vrot.slane %v829, 5
  %v832 = vor.u32 %v828, %v831
  %v833 = vrot.slane %v832, 4
  %v835 = vshll.u32 %v822, 16
  %v837 = vrot.slane %v835, 5
  %v838 = vsel %vm199, %v833, %v837
  %v840 = vshrl.u32 %v823, 16
  %v842 = vrot.slane %v840, 4
  %v843 = vshll.u32 %v823, 16
  %v845 = vrot.slane %v843, 5
  %v846 = vor.u32 %v842, %v845
  %v847 = vrot.slane %v846, 4
  %v849 = vshll.u32 %v824, 16
  %v851 = vrot.slane %v849, 5
  %v852 = vsel %vm199, %v847, %v851
  %v857 = vrot.slane %v821, 5
  %v858 = vrot.slane %v857, 4
  %v859 = vrot.slane %v822, 5
  %v860 = vsel %vm234, %v858, %v859
  %v861 = vrot.slane %v823, 5
  %v862 = vrot.slane %v861, 4
  %v863 = vrot.slane %v824, 5
  %v864 = vsel %vm234, %v862, %v863
  %v865 = vrot.slane %v826, 5
  %v866 = vrot.slane %v829, 6
  %v867 = vor.u32 %v865, %v866
  %v868 = vrot.slane %v867, 4
  %v869 = vshrl.u32 %v822, 16
  %v871 = vrot.slane %v869, 5
  %v872 = vrot.slane %v835, 6
  %v873 = vor.u32 %v871, %v872
  %v874 = vsel %vm245, %v868, %v873
  %v875 = vrot.slane %v840, 5
  %v876 = vrot.slane %v843, 6
  %v877 = vor.u32 %v875, %v876
  %v878 = vrot.slane %v877, 4
  %v879 = vshrl.u32 %v824, 16
  %v881 = vrot.slane %v879, 5
  %v882 = vrot.slane %v849, 6
  %v883 = vor.u32 %v881, %v882
  %v884 = vsel %vm245, %v878, %v883
  %v885 = vrot.slane %v821, 6
  %v886 = vrot.slane %v885, 4
  %v887 = vrot.slane %v822, 6
  %v888 = vsel %vm268, %v886, %v887
  %v889 = vrot.slane %v823, 6
  %v890 = vrot.slane %v889, 4
  %v891 = vrot.slane %v824, 6
  %v892 = vsel %vm268, %v890, %v891
  %v893 = vunpack.c.l.b16 %v821
  %v894 = vunpack.c.l.b16 %v823
  %v895 = vpack.c.b16 %v894, %v893
  %v896 = vunpack.c.l.b16 %v838
  %v897 = vunpack.c.l.b16 %v852
  %v898 = vpack.c.b16 %v897, %v896
  %899 = vrot.lane.b32.xlu0 %v898, 32
  %v900 = vpop.permute.xlu0 %899
  %v901 = vunpack.c.l.b16 %v860
  %v902 = vunpack.c.l.b16 %v864
  %v903 = vpack.c.b16 %v902, %v901
  %904 = vrot.lane.b32.xlu0 %v903, 64
  %v905 = vpop.permute.xlu0 %904
  %v906 = vunpack.c.l.b16 %v874
  %v907 = vunpack.c.l.b16 %v884
  %v908 = vpack.c.b16 %v907, %v906
  %909 = vrot.lane.b32.xlu0 %v908, 96
  %v910 = vpop.permute.xlu0 %909
  %v911 = vunpack.c.l.b16 %v888
  %v912 = vunpack.c.l.b16 %v892
  %v913 = vpack.c.b16 %v912, %v911
  %v916 = vsel %vm298, %v895, %v900
  %v918 = vsel %vm302, %v916, %v905
  %v920 = vsel %vm305, %v918, %v910
  %s922 = scalar_lea.vmem %s3, 160
  %v923 = vld [vmem:[%s922] sm:$0xf]
  %v924 = vld [vmem:[%s922 + $0x4] sm:$0xf]
  %v925 = vld [vmem:[%s922 + $0x8] sm:$0xf]
  %v926 = vld [vmem:[%s922 + $0xc] sm:$0xf]
  %v927 = vld [vmem:[%s922 + $0x10] sm:$0xf]
  %v928 = vld [vmem:[%s922 + $0x14] sm:$0xf]
  %v929 = vld [vmem:[%s922 + $0x18] sm:$0xf]
  %v930 = vld [vmem:[%s922 + $0x1c] sm:$0xf]
  %v931 = vld [vmem:[%s922 + $0x20] sm:$0xf]
  %v932 = vld [vmem:[%s922 + $0x24] sm:$0xf]
  %v933 = vld [vmem:[%s922 + $0x28] sm:$0xf]
  %v934 = vld [vmem:[%s922 + $0x2c] sm:$0xf]
  %v935 = vld [vmem:[%s922 + $0x30] sm:$0xf]
  %v936 = vld [vmem:[%s922 + $0x34] sm:$0xf]
  %v937 = vld [vmem:[%s922 + $0x38] sm:$0xf]
  %v938 = vld [vmem:[%s922 + $0x3c] sm:$0xf]
  %v939 = vld [vmem:[%s922 + $0x40] sm:$0xf]
  %v940 = vld [vmem:[%s922 + $0x44] sm:$0xf]
  %v941 = vld [vmem:[%s922 + $0x48] sm:$0xf]
  %v942 = vld [vmem:[%s922 + $0x4c] sm:$0xf]
  %s943 = scalar_lea.vmem %s4, 2
  %v944 = vld [vmem:[%s943] sm:$0x1]
  %v946 = vlaneseq
  %v947 = vshrl.u32 %v946, 7
  %v948 = vsub.s32 0, %v947
  %v949 = vrot.slane %v944, %v948
  %v971 = vunpack.c.l.b16 %v923
  %v972 = vunpack.c.l.b16 %v924
  %v973 = vunpack.c.l.b16 %v925
  %v974 = vunpack.c.l.b16 %v926
  %v975 = vunpack.c.l.b16 %v927
  %v976 = vunpack.c.l.b16 %v928
  %v977 = vunpack.c.l.b16 %v929
  %v978 = vunpack.c.l.b16 %v930
  %v979 = vunpack.c.l.b16 %v931
  %v980 = vunpack.c.l.b16 %v932
  %v981 = vunpack.c.l.b16 %v933
  %v982 = vunpack.c.l.b16 %v934
  %v983 = vunpack.c.l.b16 %v935
  %v984 = vunpack.c.l.b16 %v936
  %v985 = vunpack.c.l.b16 %v937
  %v986 = vunpack.c.l.b16 %v938
  %v987 = vunpack.c.l.b16 %v939
  %v988 = vunpack.c.l.b16 %v940
  %v989 = vunpack.c.l.b16 %v941
  %v990 = vunpack.c.l.b16 %v942
  %v991 = vpack.c.b16 %v972, %v971
  %v992 = vpack.c.b16 %v974, %v973
  %v993 = vpack.c.b16 %v976, %v975
  %v994 = vpack.c.b16 %v978, %v977
  %v995 = vpack.c.b16 %v980, %v979
  %v996 = vpack.c.b16 %v982, %v981
  %v997 = vpack.c.b16 %v984, %v983
  %v998 = vpack.c.b16 %v986, %v985
  %v999 = vpack.c.b16 %v988, %v987
  %v1000 = vpack.c.b16 %v990, %v989
  %v1012 = vsel %vm298, %v913, 0
  %1014 = vmatprep.subr.bf16.mxu0 0
  %1015 = vmatpush1.bf16.msra.mxu0 %v998
  %1016 = vmatprep.subr.bf16.mxu0 0
  %1017 = vmatpush1.bf16.msra.mxu0 %v997
  %1018 = vmatprep.subr.bf16.mxu0 0
  %1019 = vmatpush1.bf16.msra.mxu0 %v996
  %1020 = vmatprep.subr.bf16.mxu0 0
  %1021 = vmatpush1.bf16.msra.mxu0 %v995
  %1022 = vmatprep.subr.bf16.mxu0 0
  %1023 = vmatpush1.bf16.msra.mxu0 %v994
  %1024 = vmatprep.subr.bf16.mxu0 0
  %1025 = vmatpush1.bf16.msra.mxu0 %v993
  %1026 = vmatprep.subr.bf16.mxu0 0
  %1027 = vmatpush1.bf16.msra.mxu0 %v992
  %1028 = vmatprep.subr.bf16.mxu0 0
  %1029 = vmatpush1.bf16.msra.mxu0 %v991
  %1030 = vmatprep.subr.bf16.mxu0 0
  %1031 = vmatpush2.bf16.msra.mxu0 0
  %1032 = vmatprep.subr.bf16.mxu0 0
  %1033 = vmatpush2.bf16.msra.mxu0 0
  %1034 = vmatprep.subr.bf16.mxu0 0
  %1035 = vmatpush2.bf16.msra.mxu0 0
  %1036 = vmatprep.subr.bf16.mxu0 0
  %1037 = vmatpush2.bf16.msra.mxu0 0
  %1038 = vmatprep.subr.bf16.mxu0 0
  %1039 = vmatpush2.bf16.msra.mxu0 0
  %1040 = vmatprep.subr.bf16.mxu0 0
  %1041 = vmatpush2.bf16.msra.mxu0 0
  %1042 = vmatprep.subr.bf16.mxu0 0
  %1043 = vmatpush2.bf16.msra.mxu0 %v1000
  %1044 = vmatprep.subr.bf16.mxu0 0
  %1045 = vmatpush2.bf16.msra.mxu0 %v999
  %1046 = vmatprep.mubr.bf16.mxu0 %v1012
  %1047 = vmatmul.mubr.bf16.gmra.mxu0 %v920
  %v1048 = vpop.f32.mrf.mxu0
  %v1049 = vadd.f32 %v949, %v1048
  %v1050 = vpop.f32.mrf.mxu0
  %v1051 = vpop.f32.mrf.mxu0
  %v1052 = vadd.f32 %v949, %v1051
  %v1053 = vpop.f32.mrf.mxu0
  %1054 = vdwg.mxu0
  %v1055 = vsel %vm298, %v1049, 0.0
  %1056 = vadd.xlane.f32.xlu0 %v1055
  %v1057 = vpop.xlane.xlu0 %1056
  %v1058 = vsel %vm298, %v1052, 0.0
  %1059 = vadd.xlane.f32.xlu0 %v1058
  %v1060 = vpop.xlane.xlu0 %1059
  %v1061 = vmul.f32 %v1057, %v446
  %v1062 = vmul.f32 %v1060, %v446
  %v1063 = vsub.f32 %v1049, %v1061
  %v1064 = vsub.f32 %v1052, %v1062
  %v1065 = vmul.f32 %v1063, %v1063
  %v1066 = vmul.f32 %v1064, %v1064
  %v1067 = vsel %vm298, %v1065, 0.0
  %1068 = vadd.xlane.f32.xlu0 %v1067
  %v1069 = vpop.xlane.xlu0 %1068
  %v1070 = vsel %vm298, %v1066, 0.0
  %1071 = vadd.xlane.f32.xlu0 %v1070
  %v1072 = vpop.xlane.xlu0 %1071
  %v1073 = vmul.f32 %v1069, %v446
  %v1074 = vmul.f32 %v1072, %v446
  %v1075 = vadd.f32 %v1073, 1e-05
  %v1076 = vadd.f32 %v1074, 1e-05
  %v1077 = vrsqrt.pop %v1075
  %v1078 = vrsqrt.pop %v1076
  %v1079 = vmul.f32 %v1063, %v1077
  %v1080 = vmul.f32 %v1064, %v1078
  %s1081 = scalar_lea.vmem %s5, 2
  %v1082 = vld [vmem:[%s1081] sm:$0x1]
  %v1084 = vlaneseq
  %v1085 = vshrl.u32 %v1084, 7
  %v1086 = vsub.s32 0, %v1085
  %v1087 = vrot.slane %v1082, %v1086
  %v1089 = vmul.f32 %v1079, %v1087
  %v1090 = vmul.f32 %v1080, %v1087
  %s1091 = scalar_lea.vmem %s6, 2
  %v1092 = vld [vmem:[%s1091] sm:$0x1]
  %v1094 = vlaneseq
  %v1095 = vshrl.u32 %v1094, 7
  %v1096 = vsub.s32 0, %v1095
  %v1097 = vrot.slane %v1092, %v1096
  %v1099 = vadd.f32 %v1089, %v1097
  %v1100 = vadd.f32 %v1090, %v1097
  %vm1101 = vcmp.ge.f32.partialorder %v1099, 0.0
  %vm1102 = vcmp.ge.f32.partialorder %v1100, 0.0
  %v1103 = vmul.f32 %v1099, 0.2
  %v1104 = vmul.f32 %v1100, 0.2
  %v1105 = vsel %vm1101, %v1099, %v1103
  %v1106 = vsel %vm1102, %v1100, %v1104
  %v1107 = vsel %vm162, %v1105, 0.0
  %v1108 = vsel %vm163, %v1106, 0.0
  %v1109 = vpack.c.bf16 %v1108, %v1107
  %v1110 = vld [vmem:[%s7] sm:$0xf]
  %v1111 = vld [vmem:[%s7 + $0x4] sm:$0xf]
  %v1112 = vld [vmem:[%s7 + $0x8] sm:$0xf]
  %v1113 = vld [vmem:[%s7 + $0xc] sm:$0xf]
  %v1114 = vld [vmem:[%s8] sm:$0x1]
  %v1116 = vlaneseq
  %v1117 = vshrl.u32 %v1116, 7
  %v1118 = vsub.s32 0, %v1117
  %v1119 = vrot.slane %v1114, %v1118
  %v1125 = vunpack.c.l.b16 %v1110
  %v1126 = vunpack.c.l.b16 %v1111
  %v1127 = vunpack.c.l.b16 %v1112
  %v1128 = vunpack.c.l.b16 %v1113
  %v1129 = vpack.c.b16 %v1126, %v1125
  %v1130 = vpack.c.b16 %v1128, %v1127
  %v1134 = vsel %vm298, %v1109, 0
  %1136 = vmatprep.subr.bf16.mxu0 0
  %1137 = vmatpush1.bf16.msra.mxu0 0
  %1138 = vmatprep.subr.bf16.mxu0 0
  %1139 = vmatpush1.bf16.msra.mxu0 0
  %1140 = vmatprep.subr.bf16.mxu0 0
  %1141 = vmatpush1.bf16.msra.mxu0 0
  %1142 = vmatprep.subr.bf16.mxu0 0
  %1143 = vmatpush1.bf16.msra.mxu0 0
  %1144 = vmatprep.subr.bf16.mxu0 0
  %1145 = vmatpush1.bf16.msra.mxu0 0
  %1146 = vmatprep.subr.bf16.mxu0 0
  %1147 = vmatpush1.bf16.msra.mxu0 0
  %1148 = vmatprep.subr.bf16.mxu0 0
  %1149 = vmatpush1.bf16.msra.mxu0 %v1130
  %1150 = vmatprep.subr.bf16.mxu0 0
  %1151 = vmatpush1.bf16.msra.mxu0 %v1129
  %1152 = vmatprep.subr.bf16.mxu0 0
  %1153 = vmatpush2.bf16.msra.mxu0 0
  %1154 = vmatprep.subr.bf16.mxu0 0
  %1155 = vmatpush2.bf16.msra.mxu0 0
  %1156 = vmatprep.subr.bf16.mxu0 0
  %1157 = vmatpush2.bf16.msra.mxu0 0
  %1158 = vmatprep.subr.bf16.mxu0 0
  %1159 = vmatpush2.bf16.msra.mxu0 0
  %1160 = vmatprep.subr.bf16.mxu0 0
  %1161 = vmatpush2.bf16.msra.mxu0 0
  %1162 = vmatprep.subr.bf16.mxu0 0
  %1163 = vmatpush2.bf16.msra.mxu0 0
  %1164 = vmatprep.subr.bf16.mxu0 0
  %1165 = vmatpush2.bf16.msra.mxu0 0
  %1166 = vmatprep.subr.bf16.mxu0 0
  %1167 = vmatpush2.bf16.msra.mxu0 0
  %1168 = vmatprep.mubr.bf16.mxu0 0
  %1169 = vmatmul.mubr.bf16.gmra.mxu0 %v1134
  %v1170 = vpop.f32.mrf.mxu0
  %v1171 = vadd.f32 %v1119, %v1170
  %v1172 = vpop.f32.mrf.mxu0
  %v1173 = vpop.f32.mrf.mxu0
  %v1174 = vadd.f32 %v1119, %v1173
  %v1175 = vpop.f32.mrf.mxu0
  %1176 = vdwg.mxu0
  %v1177 = vcombine.high %v1171, 0.0
  %v1179 = vunpack.c.l.s4 1983009808
  %v1180 = vunpack.c.0.s8 %v1179
  %v1181 = vlaneseq
  %v1182 = vshrl.u32 %v1181, 7
  %v1183 = vsub.s32 %v1180, %v1182
  %v1184 = vrot.slane %v1171, %v1183
  %v1186 = vunpack.c.l.s4 1983009808
  %v1187 = vunpack.c.0.s8 %v1186
  %v1188 = vlaneseq
  %v1189 = vshrl.u32 %v1188, 7
  %v1190 = vsub.s32 %v1187, %v1189
  %v1191 = vrot.slane %v1177, %v1190
  %v1192 = vcombine.high %v1174, 0.0
  %v1194 = vunpack.c.l.s4 1983009808
  %v1195 = vunpack.c.0.s8 %v1194
  %v1196 = vlaneseq
  %v1197 = vshrl.u32 %v1196, 7
  %v1198 = vsub.s32 %v1195, %v1197
  %v1199 = vrot.slane %v1174, %v1198
  %v1201 = vunpack.c.l.s4 1983009808
  %v1202 = vunpack.c.0.s8 %v1201
  %v1203 = vlaneseq
  %v1204 = vshrl.u32 %v1203, 7
  %v1205 = vsub.s32 %v1202, %v1204
  %v1206 = vrot.slane %v1192, %v1205
  %v1207 = vcombine.low %v1184, %v1199
  %v1208 = vcombine.high %v1184, %v1199
  %v1210 = vunpack.c.l.s4 1934713408
  %v1211 = vunpack.c.0.s8 %v1210
  %v1212 = vlaneseq
  %v1213 = vshrl.u32 %v1212, 7
  %v1214 = vsub.s32 %v1211, %v1213
  %v1215 = vrot.slane %v1207, %v1214
  %v1217 = vunpack.c.l.s4 1934713408
  %v1218 = vunpack.c.0.s8 %v1217
  %v1219 = vlaneseq
  %v1220 = vshrl.u32 %v1219, 7
  %v1221 = vsub.s32 %v1218, %v1220
  %v1222 = vrot.slane %v1208, %v1221
  %v1223 = vcombine.low %v1191, %v1206
  %v1224 = vcombine.high %v1191, %v1206
  %v1226 = vunpack.c.l.s4 1934713408
  %v1227 = vunpack.c.0.s8 %v1226
  %v1228 = vlaneseq
  %v1229 = vshrl.u32 %v1228, 7
  %v1230 = vsub.s32 %v1227, %v1229
  %v1231 = vrot.slane %v1223, %v1230
  %v1233 = vunpack.c.l.s4 1934713408
  %v1234 = vunpack.c.0.s8 %v1233
  %v1235 = vlaneseq
  %v1236 = vshrl.u32 %v1235, 7
  %v1237 = vsub.s32 %v1234, %v1236
  %v1238 = vrot.slane %v1224, %v1237
  %v1239 = vcombine.high %v1215, 0.0
  %v1240 = vcombine.high %v1222, 0.0
  %v1241 = vcombine.high %v1231, 0.0
  %v1242 = vcombine.high %v1238, 0.0
  %v1243 = vpack.c.bf16 %v1215, %v1215
  %v1244 = vpack.c.bf16 %v1239, %v1239
  %v1245 = vpack.c.bf16 %v1222, %v1222
  %v1246 = vpack.c.bf16 %v1240, %v1240
  %v1247 = vpack.c.bf16 %v1231, %v1231
  %v1248 = vpack.c.bf16 %v1241, %v1241
  %v1249 = vpack.c.bf16 %v1238, %v1238
  %v1250 = vpack.c.bf16 %v1242, %v1242
  %vm1251 = vcmask 516096
  %1252 = vst.msk [vmem:[%s9] sm:$0x1] %vm1251, %v1243
  %1253 = vst.msk [vmem:[%s9 + $0x1] sm:$0x1] %vm1251, %v1244
  %1254 = vst.msk [vmem:[%s9 + $0x2] sm:$0x1] %vm1251, %v1245
  %1255 = vst.msk [vmem:[%s9 + $0x3] sm:$0x1] %vm1251, %v1246
  %1256 = vst.msk [vmem:[%s9 + $0x4] sm:$0x1] %vm1251, %v1247
  %1257 = vst.msk [vmem:[%s9 + $0x5] sm:$0x1] %vm1251, %v1248
  %1258 = vst.msk [vmem:[%s9 + $0x6] sm:$0x1] %vm1251, %v1249
  %1259 = vst.msk [vmem:[%s9 + $0x7] sm:$0x1] %vm1251, %v1250
  %1262 = vrot.lane.b32.xlu0 %v1171, 64
  %v1263 = vpop.permute.xlu0 %1262
  %1264 = vrot.lane.b32.xlu0 %v1174, 64
  %v1265 = vpop.permute.xlu0 %1264
  %v1268 = vcombine.high %v1263, 0.0
  %v1270 = vunpack.c.l.s4 1983009808
  %v1271 = vunpack.c.0.s8 %v1270
  %v1272 = vlaneseq
  %v1273 = vshrl.u32 %v1272, 7
  %v1274 = vsub.s32 %v1271, %v1273
  %v1275 = vrot.slane %v1263, %v1274
  %v1277 = vunpack.c.l.s4 1983009808
  %v1278 = vunpack.c.0.s8 %v1277
  %v1279 = vlaneseq
  %v1280 = vshrl.u32 %v1279, 7
  %v1281 = vsub.s32 %v1278, %v1280
  %v1282 = vrot.slane %v1268, %v1281
  %v1283 = vcombine.high %v1265, 0.0
  %v1285 = vunpack.c.l.s4 1983009808
  %v1286 = vunpack.c.0.s8 %v1285
  %v1287 = vlaneseq
  %v1288 = vshrl.u32 %v1287, 7
  %v1289 = vsub.s32 %v1286, %v1288
  %v1290 = vrot.slane %v1265, %v1289
  %v1292 = vunpack.c.l.s4 1983009808
  %v1293 = vunpack.c.0.s8 %v1292
  %v1294 = vlaneseq
  %v1295 = vshrl.u32 %v1294, 7
  %v1296 = vsub.s32 %v1293, %v1295
  %v1297 = vrot.slane %v1283, %v1296
  %v1298 = vcombine.low %v1275, %v1290
  %v1299 = vcombine.high %v1275, %v1290
  %v1301 = vunpack.c.l.s4 1934713408
  %v1302 = vunpack.c.0.s8 %v1301
  %v1303 = vlaneseq
  %v1304 = vshrl.u32 %v1303, 7
  %v1305 = vsub.s32 %v1302, %v1304
  %v1306 = vrot.slane %v1298, %v1305
  %v1308 = vunpack.c.l.s4 1934713408
  %v1309 = vunpack.c.0.s8 %v1308
  %v1310 = vlaneseq
  %v1311 = vshrl.u32 %v1310, 7
  %v1312 = vsub.s32 %v1309, %v1311
  %v1313 = vrot.slane %v1299, %v1312
  %v1314 = vcombine.low %v1282, %v1297
  %v1315 = vcombine.high %v1282, %v1297
  %v1317 = vunpack.c.l.s4 1934713408
  %v1318 = vunpack.c.0.s8 %v1317
  %v1319 = vlaneseq
  %v1320 = vshrl.u32 %v1319, 7
  %v1321 = vsub.s32 %v1318, %v1320
  %v1322 = vrot.slane %v1314, %v1321
  %v1324 = vunpack.c.l.s4 1934713408
  %v1325 = vunpack.c.0.s8 %v1324
  %v1326 = vlaneseq
  %v1327 = vshrl.u32 %v1326, 7
  %v1328 = vsub.s32 %v1325, %v1327
  %v1329 = vrot.slane %v1315, %v1328
  %v1330 = vcombine.high %v1306, 0.0
  %v1331 = vcombine.high %v1313, 0.0
  %v1332 = vcombine.high %v1322, 0.0
  %v1333 = vcombine.high %v1329, 0.0
  %v1334 = vpack.c.bf16 %v1306, %v1306
  %v1335 = vpack.c.bf16 %v1330, %v1330
  %v1336 = vpack.c.bf16 %v1313, %v1313
  %v1337 = vpack.c.bf16 %v1331, %v1331
  %v1338 = vpack.c.bf16 %v1322, %v1322
  %v1339 = vpack.c.bf16 %v1332, %v1332
  %v1340 = vpack.c.bf16 %v1329, %v1329
  %v1341 = vpack.c.bf16 %v1333, %v1333
  %s1342 = scalar_lea.vmem %s9, 8
  %1343 = vst.msk [vmem:[%s1342] sm:$0x1] %vm1251, %v1334
  %1344 = vst.msk [vmem:[%s1342 + $0x1] sm:$0x1] %vm1251, %v1335
  %1345 = vst.msk [vmem:[%s1342 + $0x2] sm:$0x1] %vm1251, %v1336
  %1346 = vst.msk [vmem:[%s1342 + $0x3] sm:$0x1] %vm1251, %v1337
  %1347 = vst.msk [vmem:[%s1342 + $0x4] sm:$0x1] %vm1251, %v1338
  %1348 = vst.msk [vmem:[%s1342 + $0x5] sm:$0x1] %vm1251, %v1339
  %1349 = vst.msk [vmem:[%s1342 + $0x6] sm:$0x1] %vm1251, %v1340
  %1350 = vst.msk [vmem:[%s1342 + $0x7] sm:$0x1] %vm1251, %v1341
  // Predicated region
  $region38: #{text_encoder_forward.2} parent=0 // pred_check
    _
  $region39: #{text_encoder_forward.2} parent=0 // pred_check_branch
    %1352 = sbr.rel (0) target = $region41
  $region40: #{text_encoder_forward.2} parent=0 // pred_region
    _
  $region41: #{text_encoder_forward.2} parent=0 // pred_fallthru
    _
  // Predicated region
  $region42: #{text_encoder_forward.2} parent=0 // pred_check
    _
  $region43: #{text_encoder_forward.2} parent=0 // pred_check_branch
    %1354 = sbr.rel (0) target = $region45
  $region44: #{text_encoder_forward.2} parent=0 // pred_region
    _
  $region45: #{text_encoder_forward.2} parent=0 // pred_fallthru
    _

</llo_original>
